<compile_context>
chip_gen: v6e
topology: v6e:2x2x1
jax: 0.10.0
libtpu: 0.0.40
codegen_flags: <defaults>
</compile_context>

<pallas_src>
import functools

import jax
import jax.numpy as jnp
import numpy as np
from jax import lax
from jax.experimental import pallas as pl
from jax.experimental.pallas import tpu as pltpu


# -----------------------------------------------------------------------------
# Kernel: the full bidirectional GRU recurrence in ONE invocation (no grid).
# -----------------------------------------------------------------------------
def bigru_recurrence_kernel(gi_ref, len_ref, whh_ref, bhh_ref, out_ref, final_ref):
    """Bidirectional GRU recurrence.

    gi_ref:    (T, B, 6H)  hoisted input projections (+ b_ih), [fwd 3H | bwd 3H]
    len_ref:   (B, 1)      int32 sequence lengths (sorted descending)
    whh_ref:   (2H, 6H)    block-diagonal hidden weights (fwd top-left, bwd bottom-right)
    bhh_ref:   (1, 6H)     [b_hh_f | b_hh_b]
    out_ref:   (T, B, 2H)  outputs (forward time order), fwd in [..., :H], bwd in [..., H:]
    final_ref: (B, 2H)     final hidden [h_f | h_b]
    """
    T, B, G = gi_ref.shape
    H = G // 6
    lengths = len_ref[...]                                 # (B, 1) int32

    def gru_gates(gi_d, gh_d, h_d, off):
        # `off` selects the direction's 3H-wide gate block (0 = fwd, 3H = bwd).
        r = jax.nn.sigmoid(gi_d[:, off:off + H] + gh_d[:, off:off + H])
        z = jax.nn.sigmoid(gi_d[:, off + H:off + 2 * H] + gh_d[:, off + H:off + 2 * H])
        n = jnp.tanh(gi_d[:, off + 2 * H:off + 3 * H] + r * gh_d[:, off + 2 * H:off + 3 * H])
        return (1.0 - z) * n + z * h_d

    def step(t, carry):
        h_f, h_b = carry                                   # (B, H) each
        tb = T - 1 - t
        # One fused MXU issue per step for BOTH directions.
        h_cat = jnp.concatenate([h_f, h_b], axis=-1)       # (B, 2H)
        gh = jnp.dot(h_cat, whh_ref[...],
                     preferred_element_type=jnp.float32) + bhh_ref[...]   # (B, 6H)
        gi_f = gi_ref[t]                                   # (B, 6H), forward time
        gi_b = gi_ref[tb]                                  # (B, 6H), reversed time
        h_f_new = gru_gates(gi_f, gh, h_f, 0)
        h_b_new = gru_gates(gi_b, gh, h_b, 3 * H)
        valid_f = lengths > t                              # (B, 1) bool
        valid_b = lengths > tb
        h_f = jnp.where(valid_f, h_f_new, h_f)             # freeze past sequence end
        h_b = jnp.where(valid_b, h_b_new, h_b)
        # Packed-sequence semantics: zero padding beyond each row's length.
        out_ref[t, :, 0:H] = jnp.where(valid_f, h_f_new, 0.0)
        out_ref[tb, :, H:2 * H] = jnp.where(valid_b, h_b_new, 0.0)   # stored at fwd time idx
        return h_f, h_b

    h0 = jnp.zeros((B, H), jnp.float32)
    # T is small here; fully unroll for scheduler visibility. For long
    # sequences use a time-blocked grid instead of unrolling.
    h_f, h_b = lax.fori_loop(0, T, step, (h0, h0), unroll=True)
    final_ref[...] = jnp.concatenate([h_f, h_b], axis=-1)


# -----------------------------------------------------------------------------
# Wrapper: one bidirectional GRU layer.
# -----------------------------------------------------------------------------
def _fuse_layer_params(lp, H):
    w_ih = jnp.concatenate([lp["w_ih_f"], lp["w_ih_b"]], axis=1)     # (Din, 6H)
    b_ih = jnp.concatenate([lp["b_ih_f"], lp["b_ih_b"]], axis=1)     # (1, 6H)
    zero = jnp.zeros((H, 3 * H), lp["w_hh_f"].dtype)
    w_hh = jnp.concatenate(                                          # (2H, 6H) block-diagonal
        [jnp.concatenate([lp["w_hh_f"], zero], axis=1),
         jnp.concatenate([zero, lp["w_hh_b"]], axis=1)], axis=0)
    b_hh = jnp.concatenate([lp["b_hh_f"], lp["b_hh_b"]], axis=1)     # (1, 6H)
    return w_ih, b_ih, w_hh, b_hh


def _bigru_layer(x_tbd, len_col, lp, H):
    """x_tbd: (T, B, Din) f32 (time-major). Returns ((T,B,2H) outputs, (B,2H) final)."""
    T, B, Din = x_tbd.shape
    w_ih, b_ih, w_hh, b_hh = _fuse_layer_params(lp, H)

    # Hoisted input projection: one big matmul for all T steps and both
    # directions (M = T*B rows actually fills the MXU; it is time-invariant so
    # it does not belong on the sequential critical path inside the kernel).
    gi = jnp.dot(x_tbd.reshape(T * B, Din), w_ih) + b_ih
    gi = gi.reshape(T, B, 6 * H)

    vmem = pl.BlockSpec(memory_space=pltpu.MemorySpace.VMEM)

    flops = int(2 * T * B * (2 * H) * (6 * H) + 12 * T * B * 6 * H)
    transcendentals = int(T * B * 6 * H)
    bytes_accessed = int(4 * (T * B * 6 * H + 2 * H * 6 * H + 6 * H + B
                              + T * B * 2 * H + B * 2 * H))

    out, final = pl.pallas_call(
        bigru_recurrence_kernel,
        out_shape=(
            jax.ShapeDtypeStruct((T, B, 2 * H), jnp.float32),
            jax.ShapeDtypeStruct((B, 2 * H), jnp.float32),
        ),
        in_specs=[vmem, vmem, vmem, vmem],
        out_specs=(vmem, vmem),
        cost_estimate=pl.CostEstimate(flops=flops,
                                      transcendentals=transcendentals,
                                      bytes_accessed=bytes_accessed),
    )(gi, len_col, w_hh, b_hh)
    return out, final


def encoder_forward(x, mask, lengths, params, hidden_size):
    """x: (B, T, D) f32; lengths: (B,) int sorted descending (lengths[0] == T).

    Returns (output (B, T, 2H), final (num_layers, B, 2H)), matching
    Encoder.forward's (output, torch.cat([fwd_final, bwd_final], dim=2)).
    """
    del mask                                    # accepted for API parity, unused by forward
    B, T, _ = x.shape
    len_col = lengths.reshape(B, 1).astype(jnp.int32)
    inp = jnp.transpose(x, (1, 0, 2))           # (T, B, D): time-major between layers
    finals = []
    for lp in params:
        inp, fin = _bigru_layer(inp, len_col, lp, hidden_size)
        finals.append(fin)
    output = jnp.transpose(inp, (1, 0, 2))      # single transpose at the very end
    return output, jnp.stack(finals, axis=0)


# -----------------------------------------------------------------------------
# Parameter init (PyTorch GRU layout, weights pre-transposed to (in, 3H)).
# -----------------------------------------------------------------------------
def init_params(key, input_size, hidden_size, num_layers):
    params = []
    H = hidden_size
    bound = 1.0 / np.sqrt(H)
    k = key
    for layer in range(num_layers):
        Din = input_size if layer == 0 else 2 * hidden_size
        keys = jax.random.split(k, 9)
        k = keys[0]
        u = lambda kk, shape: jax.random.uniform(kk, shape, jnp.float32, -bound, bound)
        params.append(dict(
            w_ih_f=u(keys[1], (Din, 3 * H)), w_hh_f=u(keys[2], (H, 3 * H)),
            b_ih_f=u(keys[3], (1, 3 * H)),   b_hh_f=u(keys[4], (1, 3 * H)),
            w_ih_b=u(keys[5], (Din, 3 * H)), w_hh_b=u(keys[6], (H, 3 * H)),
            b_ih_b=u(keys[7], (1, 3 * H)),   b_hh_b=u(keys[8], (1, 3 * H)),
        ))
    return params


# -----------------------------------------------------------------------------
# Pure-JAX reference (same packed-sequence semantics) for verification.
# -----------------------------------------------------------------------------
def _gru_cell_ref(x, h, w_ih, w_hh, b_ih, b_hh, H):
    gi = x @ w_ih + b_ih
    gh = h @ w_hh + b_hh
    r = jax.nn.sigmoid(gi[:, :H] + gh[:, :H])
    z = jax.nn.sigmoid(gi[:, H:2 * H] + gh[:, H:2 * H])
    n = jnp.tanh(gi[:, 2 * H:] + r * gh[:, 2 * H:])
    return (1.0 - z) * n + z * h


def encoder_reference(x, lengths, params, H):
    B, T, _ = x.shape
    inp = x
    finals = []
    for lp in params:
        h = jnp.zeros((B, H), jnp.float32)
        outs_f = []
        for t in range(T):
            hn = _gru_cell_ref(inp[:, t], h, lp["w_ih_f"], lp["w_hh_f"],
                               lp["b_ih_f"], lp["b_hh_f"], H)
            valid = (lengths > t)[:, None]
            h = jnp.where(valid, hn, h)
            outs_f.append(jnp.where(valid, hn, 0.0))
        hf = h
        h = jnp.zeros((B, H), jnp.float32)
        outs_b = [None] * T
        for t in reversed(range(T)):
            hn = _gru_cell_ref(inp[:, t], h, lp["w_ih_b"], lp["w_hh_b"],
                               lp["b_ih_b"], lp["b_hh_b"], H)
            valid = (lengths > t)[:, None]
            h = jnp.where(valid, hn, h)
            outs_b[t] = jnp.where(valid, hn, 0.0)
        hb = h
        inp = jnp.concatenate([jnp.stack(outs_f, 1), jnp.stack(outs_b, 1)], -1)
        finals.append(jnp.concatenate([hf, hb], -1))
    return inp, jnp.stack(finals, 0)


if __name__ == "__main__":
    # Encoder(input_size=16, hidden_size=32, num_layers=2)
    B, T, D, H = 4, 8, 16, 32
    num_layers = 2

    key = jax.random.PRNGKey(0)
    kx, kp = jax.random.split(key)
    x = jax.random.normal(kx, (B, T, D), jnp.float32)
    lengths = jnp.array([8, 6, 5, 3], dtype=jnp.int32)          # sorted desc, lengths[0] == T
    mask = (jnp.arange(T)[None, :] < lengths[:, None])          # unused by forward (API parity)

    params = init_params(kp, D, H, num_layers)

    fwd = jax.jit(functools.partial(encoder_forward, params=params, hidden_size=H))
    output, final = fwd(x, mask, lengths)
    jax.block_until_ready((output, final))

    ref_out, ref_final = encoder_reference(x, lengths, params, H)
    assert np.allclose(np.asarray(output), np.asarray(ref_out), atol=1e-4, rtol=1e-4)
    assert np.allclose(np.asarray(final), np.asarray(ref_final), atol=1e-4, rtol=1e-4)

    print("KERNEL_OK")
</pallas_src>

<mosaic_0001>
module attributes {stable_mosaic.version = 11 : i64} {
  func.func @bigru_recurrence_kernel(%arg0: memref<8x4x192xf32, #tpu.memory_space<vmem>>, %arg1: memref<4x1xi32, #tpu.memory_space<vmem>>, %arg2: memref<64x192xf32, #tpu.memory_space<vmem>>, %arg3: memref<1x192xf32, #tpu.memory_space<vmem>>, %arg4: memref<8x4x64xf32, #tpu.memory_space<vmem>>, %arg5: memref<4x64xf32, #tpu.memory_space<vmem>>) attributes {dimension_semantics = [], scalar_prefetch = 0 : i64, scratch_operands = 0 : i64, tpu.core_type = #tpu.core_type<tc>} {
    %c0 = arith.constant 0 : index
    %c0_0 = arith.constant 0 : index
    %0 = vector.load %arg1[%c0, %c0_0] : memref<4x1xi32, #tpu.memory_space<vmem>>, vector<4x1xi32>
    %cst = arith.constant 0.000000e+00 : f32
    %1 = vector.broadcast %cst : f32 to vector<4x32xf32>
    %c0_i32 = arith.constant 0 : i32
    %c7_i32 = arith.constant 7 : i32
    %2 = arith.subi %c7_i32, %c0_i32 : i32
    %3 = tpu.concatenate %1, %1 in 1 : vector<4x32xf32>, vector<4x32xf32> -> vector<4x64xf32>
    %c0_1 = arith.constant 0 : index
    %c0_2 = arith.constant 0 : index
    %4 = vector.load %arg2[%c0_1, %c0_2] : memref<64x192xf32, #tpu.memory_space<vmem>>, vector<64x192xf32>
    %cst_3 = arith.constant dense<0.000000e+00> : vector<4x192xf32>
    %5 = tpu.matmul %3, %4, %cst_3 {dimension_numbers = #tpu.dot_dimension_numbers<[1], [0], [0], [1], [0, 0, 1, 1], [], []>} : vector<4x64xf32>, vector<64x192xf32>, vector<4x192xf32> -> vector<4x192xf32>
    %c0_4 = arith.constant 0 : index
    %c0_5 = arith.constant 0 : index
    %6 = vector.load %arg3[%c0_4, %c0_5] : memref<1x192xf32, #tpu.memory_space<vmem>>, vector<1x192xf32>
    %7 = vector.broadcast %6 : vector<1x192xf32> to vector<4x192xf32>
    %8 = arith.addf %5, %7 : vector<4x192xf32>
    %9 = arith.index_cast %c0_i32 : i32 to index
    %c0_6 = arith.constant 0 : index
    %c0_7 = arith.constant 0 : index
    %10 = vector.load %arg0[%9, %c0_6, %c0_7] : memref<8x4x192xf32, #tpu.memory_space<vmem>>, vector<1x4x192xf32>
    %11 = vector.shape_cast %10 : vector<1x4x192xf32> to vector<4x192xf32>
    %12 = arith.index_cast %2 : i32 to index
    %c0_8 = arith.constant 0 : index
    %c0_9 = arith.constant 0 : index
    %13 = vector.load %arg0[%12, %c0_8, %c0_9] : memref<8x4x192xf32, #tpu.memory_space<vmem>>, vector<1x4x192xf32>
    %14 = vector.shape_cast %13 : vector<1x4x192xf32> to vector<4x192xf32>
    %15 = vector.extract_strided_slice %11 {offsets = [0, 0], sizes = [4, 32], strides = [1, 1]} : vector<4x192xf32> to vector<4x32xf32>
    %16 = vector.extract_strided_slice %8 {offsets = [0, 0], sizes = [4, 32], strides = [1, 1]} : vector<4x192xf32> to vector<4x32xf32>
    %17 = arith.addf %15, %16 : vector<4x32xf32>
    %18 = arith.negf %17 : vector<4x32xf32>
    %19 = math.exp %18 : vector<4x32xf32>
    %cst_10 = arith.constant 1.000000e+00 : f32
    %20 = vector.broadcast %cst_10 : f32 to vector<4x32xf32>
    %21 = arith.addf %20, %19 : vector<4x32xf32>
    %22 = arith.divf %20, %21 : vector<4x32xf32>
    %23 = vector.extract_strided_slice %11 {offsets = [0, 32], sizes = [4, 32], strides = [1, 1]} : vector<4x192xf32> to vector<4x32xf32>
    %24 = vector.extract_strided_slice %8 {offsets = [0, 32], sizes = [4, 32], strides = [1, 1]} : vector<4x192xf32> to vector<4x32xf32>
    %25 = arith.addf %23, %24 : vector<4x32xf32>
    %26 = arith.negf %25 : vector<4x32xf32>
    %27 = math.exp %26 : vector<4x32xf32>
    %cst_11 = arith.constant 1.000000e+00 : f32
    %28 = vector.broadcast %cst_11 : f32 to vector<4x32xf32>
    %29 = arith.addf %28, %27 : vector<4x32xf32>
    %30 = arith.divf %28, %29 : vector<4x32xf32>
    %31 = vector.extract_strided_slice %11 {offsets = [0, 64], sizes = [4, 32], strides = [1, 1]} : vector<4x192xf32> to vector<4x32xf32>
    %32 = vector.extract_strided_slice %8 {offsets = [0, 64], sizes = [4, 32], strides = [1, 1]} : vector<4x192xf32> to vector<4x32xf32>
    %33 = arith.mulf %22, %32 : vector<4x32xf32>
    %34 = arith.addf %31, %33 : vector<4x32xf32>
    %35 = math.tanh %34 : vector<4x32xf32>
    %cst_12 = arith.constant 1.000000e+00 : f32
    %36 = vector.broadcast %cst_12 : f32 to vector<4x32xf32>
    %37 = arith.subf %36, %30 : vector<4x32xf32>
    %38 = arith.mulf %37, %35 : vector<4x32xf32>
    %39 = arith.mulf %30, %1 : vector<4x32xf32>
    %40 = arith.addf %38, %39 : vector<4x32xf32>
    %41 = vector.extract_strided_slice %14 {offsets = [0, 96], sizes = [4, 32], strides = [1, 1]} : vector<4x192xf32> to vector<4x32xf32>
    %42 = vector.extract_strided_slice %8 {offsets = [0, 96], sizes = [4, 32], strides = [1, 1]} : vector<4x192xf32> to vector<4x32xf32>
    %43 = arith.addf %41, %42 : vector<4x32xf32>
    %44 = arith.negf %43 : vector<4x32xf32>
    %45 = math.exp %44 : vector<4x32xf32>
    %cst_13 = arith.constant 1.000000e+00 : f32
    %46 = vector.broadcast %cst_13 : f32 to vector<4x32xf32>
    %47 = arith.addf %46, %45 : vector<4x32xf32>
    %48 = arith.divf %46, %47 : vector<4x32xf32>
    %49 = vector.extract_strided_slice %14 {offsets = [0, 128], sizes = [4, 32], strides = [1, 1]} : vector<4x192xf32> to vector<4x32xf32>
    %50 = vector.extract_strided_slice %8 {offsets = [0, 128], sizes = [4, 32], strides = [1, 1]} : vector<4x192xf32> to vector<4x32xf32>
    %51 = arith.addf %49, %50 : vector<4x32xf32>
    %52 = arith.negf %51 : vector<4x32xf32>
    %53 = math.exp %52 : vector<4x32xf32>
    %cst_14 = arith.constant 1.000000e+00 : f32
    %54 = vector.broadcast %cst_14 : f32 to vector<4x32xf32>
    %55 = arith.addf %54, %53 : vector<4x32xf32>
    %56 = arith.divf %54, %55 : vector<4x32xf32>
    %57 = vector.extract_strided_slice %14 {offsets = [0, 160], sizes = [4, 32], strides = [1, 1]} : vector<4x192xf32> to vector<4x32xf32>
    %58 = vector.extract_strided_slice %8 {offsets = [0, 160], sizes = [4, 32], strides = [1, 1]} : vector<4x192xf32> to vector<4x32xf32>
    %59 = arith.mulf %48, %58 : vector<4x32xf32>
    %60 = arith.addf %57, %59 : vector<4x32xf32>
    %61 = math.tanh %60 : vector<4x32xf32>
    %cst_15 = arith.constant 1.000000e+00 : f32
    %62 = vector.broadcast %cst_15 : f32 to vector<4x32xf32>
    %63 = arith.subf %62, %56 : vector<4x32xf32>
    %64 = arith.mulf %63, %61 : vector<4x32xf32>
    %65 = arith.mulf %56, %1 : vector<4x32xf32>
    %66 = arith.addf %64, %65 : vector<4x32xf32>
    %67 = vector.broadcast %c0_i32 : i32 to vector<4x1xi32>
    %68 = arith.cmpi sgt, %0, %67 : vector<4x1xi32>
    %69 = vector.broadcast %2 : i32 to vector<4x1xi32>
    %70 = arith.cmpi sgt, %0, %69 : vector<4x1xi32>
    %71 = vector.shape_cast %68 : vector<4x1xi1> to vector<4x1xi1>
    %72 = vector.broadcast %71 : vector<4x1xi1> to vector<4x32xi1>
    %73 = arith.select %72, %40, %1 : vector<4x32xi1>, vector<4x32xf32>
    %74 = vector.shape_cast %70 : vector<4x1xi1> to vector<4x1xi1>
    %75 = vector.broadcast %74 : vector<4x1xi1> to vector<4x32xi1>
    %76 = arith.select %75, %66, %1 : vector<4x32xi1>, vector<4x32xf32>
    %cst_16 = arith.constant 0.000000e+00 : f32
    %77 = vector.shape_cast %68 : vector<4x1xi1> to vector<4x1xi1>
    %78 = vector.broadcast %77 : vector<4x1xi1> to vector<4x32xi1>
    %79 = vector.broadcast %cst_16 : f32 to vector<4x32xf32>
    %80 = arith.select %78, %40, %79 : vector<4x32xi1>, vector<4x32xf32>
    %81 = arith.index_cast %c0_i32 : i32 to index
    %c0_17 = arith.constant 0 : index
    %c0_18 = arith.constant 0 : index
    %82 = vector.load %arg4[%81, %c0_17, %c0_18] : memref<8x4x64xf32, #tpu.memory_space<vmem>>, vector<1x4x32xf32>
    %83 = vector.shape_cast %82 : vector<1x4x32xf32> to vector<4x32xf32>
    %84 = vector.shape_cast %80 : vector<4x32xf32> to vector<1x4x32xf32>
    tpu.vector_store %arg4[%81, %c0_17, %c0_18], %84 {strides = array<i32>} : memref<8x4x64xf32, #tpu.memory_space<vmem>>, vector<1x4x32xf32>,
    %cst_19 = arith.constant 0.000000e+00 : f32
    %85 = vector.shape_cast %70 : vector<4x1xi1> to vector<4x1xi1>
    %86 = vector.broadcast %85 : vector<4x1xi1> to vector<4x32xi1>
    %87 = vector.broadcast %cst_19 : f32 to vector<4x32xf32>
    %88 = arith.select %86, %66, %87 : vector<4x32xi1>, vector<4x32xf32>
    %89 = arith.index_cast %2 : i32 to index
    %c0_20 = arith.constant 0 : index
    %c32 = arith.constant 32 : index
    %90 = vector.load %arg4[%89, %c0_20, %c32] : memref<8x4x64xf32, #tpu.memory_space<vmem>>, vector<1x4x32xf32>
    %91 = vector.shape_cast %90 : vector<1x4x32xf32> to vector<4x32xf32>
    %92 = vector.shape_cast %88 : vector<4x32xf32> to vector<1x4x32xf32>
    tpu.vector_store %arg4[%89, %c0_20, %c32], %92 {strides = array<i32>} : memref<8x4x64xf32, #tpu.memory_space<vmem>>, vector<1x4x32xf32>,
    %c1_i32 = arith.constant 1 : i32
    %c7_i32_21 = arith.constant 7 : i32
    %93 = arith.subi %c7_i32_21, %c1_i32 : i32
    %94 = tpu.concatenate %73, %76 in 1 : vector<4x32xf32>, vector<4x32xf32> -> vector<4x64xf32>
    %c0_22 = arith.constant 0 : index
    %c0_23 = arith.constant 0 : index
    %95 = vector.load %arg2[%c0_22, %c0_23] : memref<64x192xf32, #tpu.memory_space<vmem>>, vector<64x192xf32>
    %cst_24 = arith.constant dense<0.000000e+00> : vector<4x192xf32>
    %96 = tpu.matmul %94, %95, %cst_24 {dimension_numbers = #tpu.dot_dimension_numbers<[1], [0], [0], [1], [0, 0, 1, 1], [], []>} : vector<4x64xf32>, vector<64x192xf32>, vector<4x192xf32> -> vector<4x192xf32>
    %c0_25 = arith.constant 0 : index
    %c0_26 = arith.constant 0 : index
    %97 = vector.load %arg3[%c0_25, %c0_26] : memref<1x192xf32, #tpu.memory_space<vmem>>, vector<1x192xf32>
    %98 = vector.broadcast %97 : vector<1x192xf32> to vector<4x192xf32>
    %99 = arith.addf %96, %98 : vector<4x192xf32>
    %100 = arith.index_cast %c1_i32 : i32 to index
    %c0_27 = arith.constant 0 : index
    %c0_28 = arith.constant 0 : index
    %101 = vector.load %arg0[%100, %c0_27, %c0_28] : memref<8x4x192xf32, #tpu.memory_space<vmem>>, vector<1x4x192xf32>
    %102 = vector.shape_cast %101 : vector<1x4x192xf32> to vector<4x192xf32>
    %103 = arith.index_cast %93 : i32 to index
    %c0_29 = arith.constant 0 : index
    %c0_30 = arith.constant 0 : index
    %104 = vector.load %arg0[%103, %c0_29, %c0_30] : memref<8x4x192xf32, #tpu.memory_space<vmem>>, vector<1x4x192xf32>
    %105 = vector.shape_cast %104 : vector<1x4x192xf32> to vector<4x192xf32>
    %106 = vector.extract_strided_slice %102 {offsets = [0, 0], sizes = [4, 32], strides = [1, 1]} : vector<4x192xf32> to vector<4x32xf32>
    %107 = vector.extract_strided_slice %99 {offsets = [0, 0], sizes = [4, 32], strides = [1, 1]} : vector<4x192xf32> to vector<4x32xf32>
    %108 = arith.addf %106, %107 : vector<4x32xf32>
    %109 = arith.negf %108 : vector<4x32xf32>
    %110 = math.exp %109 : vector<4x32xf32>
    %cst_31 = arith.constant 1.000000e+00 : f32
    %111 = vector.broadcast %cst_31 : f32 to vector<4x32xf32>
    %112 = arith.addf %111, %110 : vector<4x32xf32>
    %113 = arith.divf %111, %112 : vector<4x32xf32>
    %114 = vector.extract_strided_slice %102 {offsets = [0, 32], sizes = [4, 32], strides = [1, 1]} : vector<4x192xf32> to vector<4x32xf32>
    %115 = vector.extract_strided_slice %99 {offsets = [0, 32], sizes = [4, 32], strides = [1, 1]} : vector<4x192xf32> to vector<4x32xf32>
    %116 = arith.addf %114, %115 : vector<4x32xf32>
    %117 = arith.negf %116 : vector<4x32xf32>
    %118 = math.exp %117 : vector<4x32xf32>
    %cst_32 = arith.constant 1.000000e+00 : f32
    %119 = vector.broadcast %cst_32 : f32 to vector<4x32xf32>
    %120 = arith.addf %119, %118 : vector<4x32xf32>
    %121 = arith.divf %119, %120 : vector<4x32xf32>
    %122 = vector.extract_strided_slice %102 {offsets = [0, 64], sizes = [4, 32], strides = [1, 1]} : vector<4x192xf32> to vector<4x32xf32>
    %123 = vector.extract_strided_slice %99 {offsets = [0, 64], sizes = [4, 32], strides = [1, 1]} : vector<4x192xf32> to vector<4x32xf32>
    %124 = arith.mulf %113, %123 : vector<4x32xf32>
    %125 = arith.addf %122, %124 : vector<4x32xf32>
    %126 = math.tanh %125 : vector<4x32xf32>
    %cst_33 = arith.constant 1.000000e+00 : f32
    %127 = vector.broadcast %cst_33 : f32 to vector<4x32xf32>
    %128 = arith.subf %127, %121 : vector<4x32xf32>
    %129 = arith.mulf %128, %126 : vector<4x32xf32>
    %130 = arith.mulf %121, %73 : vector<4x32xf32>
    %131 = arith.addf %129, %130 : vector<4x32xf32>
    %132 = vector.extract_strided_slice %105 {offsets = [0, 96], sizes = [4, 32], strides = [1, 1]} : vector<4x192xf32> to vector<4x32xf32>
    %133 = vector.extract_strided_slice %99 {offsets = [0, 96], sizes = [4, 32], strides = [1, 1]} : vector<4x192xf32> to vector<4x32xf32>
    %134 = arith.addf %132, %133 : vector<4x32xf32>
    %135 = arith.negf %134 : vector<4x32xf32>
    %136 = math.exp %135 : vector<4x32xf32>
    %cst_34 = arith.constant 1.000000e+00 : f32
    %137 = vector.broadcast %cst_34 : f32 to vector<4x32xf32>
    %138 = arith.addf %137, %136 : vector<4x32xf32>
    %139 = arith.divf %137, %138 : vector<4x32xf32>
    %140 = vector.extract_strided_slice %105 {offsets = [0, 128], sizes = [4, 32], strides = [1, 1]} : vector<4x192xf32> to vector<4x32xf32>
    %141 = vector.extract_strided_slice %99 {offsets = [0, 128], sizes = [4, 32], strides = [1, 1]} : vector<4x192xf32> to vector<4x32xf32>
    %142 = arith.addf %140, %141 : vector<4x32xf32>
    %143 = arith.negf %142 : vector<4x32xf32>
    %144 = math.exp %143 : vector<4x32xf32>
    %cst_35 = arith.constant 1.000000e+00 : f32
    %145 = vector.broadcast %cst_35 : f32 to vector<4x32xf32>
    %146 = arith.addf %145, %144 : vector<4x32xf32>
    %147 = arith.divf %145, %146 : vector<4x32xf32>
    %148 = vector.extract_strided_slice %105 {offsets = [0, 160], sizes = [4, 32], strides = [1, 1]} : vector<4x192xf32> to vector<4x32xf32>
    %149 = vector.extract_strided_slice %99 {offsets = [0, 160], sizes = [4, 32], strides = [1, 1]} : vector<4x192xf32> to vector<4x32xf32>
    %150 = arith.mulf %139, %149 : vector<4x32xf32>
    %151 = arith.addf %148, %150 : vector<4x32xf32>
    %152 = math.tanh %151 : vector<4x32xf32>
    %cst_36 = arith.constant 1.000000e+00 : f32
    %153 = vector.broadcast %cst_36 : f32 to vector<4x32xf32>
    %154 = arith.subf %153, %147 : vector<4x32xf32>
    %155 = arith.mulf %154, %152 : vector<4x32xf32>
    %156 = arith.mulf %147, %76 : vector<4x32xf32>
    %157 = arith.addf %155, %156 : vector<4x32xf32>
    %158 = vector.broadcast %c1_i32 : i32 to vector<4x1xi32>
    %159 = arith.cmpi sgt, %0, %158 : vector<4x1xi32>
    %160 = vector.broadcast %93 : i32 to vector<4x1xi32>
    %161 = arith.cmpi sgt, %0, %160 : vector<4x1xi32>
    %162 = vector.shape_cast %159 : vector<4x1xi1> to vector<4x1xi1>
    %163 = vector.broadcast %162 : vector<4x1xi1> to vector<4x32xi1>
    %164 = arith.select %163, %131, %73 : vector<4x32xi1>, vector<4x32xf32>
    %165 = vector.shape_cast %161 : vector<4x1xi1> to vector<4x1xi1>
    %166 = vector.broadcast %165 : vector<4x1xi1> to vector<4x32xi1>
    %167 = arith.select %166, %157, %76 : vector<4x32xi1>, vector<4x32xf32>
    %cst_37 = arith.constant 0.000000e+00 : f32
    %168 = vector.shape_cast %159 : vector<4x1xi1> to vector<4x1xi1>
    %169 = vector.broadcast %168 : vector<4x1xi1> to vector<4x32xi1>
    %170 = vector.broadcast %cst_37 : f32 to vector<4x32xf32>
    %171 = arith.select %169, %131, %170 : vector<4x32xi1>, vector<4x32xf32>
    %172 = arith.index_cast %c1_i32 : i32 to index
    %c0_38 = arith.constant 0 : index
    %c0_39 = arith.constant 0 : index
    %173 = vector.load %arg4[%172, %c0_38, %c0_39] : memref<8x4x64xf32, #tpu.memory_space<vmem>>, vector<1x4x32xf32>
    %174 = vector.shape_cast %173 : vector<1x4x32xf32> to vector<4x32xf32>
    %175 = vector.shape_cast %171 : vector<4x32xf32> to vector<1x4x32xf32>
    tpu.vector_store %arg4[%172, %c0_38, %c0_39], %175 {strides = array<i32>} : memref<8x4x64xf32, #tpu.memory_space<vmem>>, vector<1x4x32xf32>,
    %cst_40 = arith.constant 0.000000e+00 : f32
    %176 = vector.shape_cast %161 : vector<4x1xi1> to vector<4x1xi1>
    %177 = vector.broadcast %176 : vector<4x1xi1> to vector<4x32xi1>
    %178 = vector.broadcast %cst_40 : f32 to vector<4x32xf32>
    %179 = arith.select %177, %157, %178 : vector<4x32xi1>, vector<4x32xf32>
    %180 = arith.index_cast %93 : i32 to index
    %c0_41 = arith.constant 0 : index
    %c32_42 = arith.constant 32 : index
    %181 = vector.load %arg4[%180, %c0_41, %c32_42] : memref<8x4x64xf32, #tpu.memory_space<vmem>>, vector<1x4x32xf32>
    %182 = vector.shape_cast %181 : vector<1x4x32xf32> to vector<4x32xf32>
    %183 = vector.shape_cast %179 : vector<4x32xf32> to vector<1x4x32xf32>
    tpu.vector_store %arg4[%180, %c0_41, %c32_42], %183 {strides = array<i32>} : memref<8x4x64xf32, #tpu.memory_space<vmem>>, vector<1x4x32xf32>,
    %c2_i32 = arith.constant 2 : i32
    %c7_i32_43 = arith.constant 7 : i32
    %184 = arith.subi %c7_i32_43, %c2_i32 : i32
    %185 = tpu.concatenate %164, %167 in 1 : vector<4x32xf32>, vector<4x32xf32> -> vector<4x64xf32>
    %c0_44 = arith.constant 0 : index
    %c0_45 = arith.constant 0 : index
    %186 = vector.load %arg2[%c0_44, %c0_45] : memref<64x192xf32, #tpu.memory_space<vmem>>, vector<64x192xf32>
    %cst_46 = arith.constant dense<0.000000e+00> : vector<4x192xf32>
    %187 = tpu.matmul %185, %186, %cst_46 {dimension_numbers = #tpu.dot_dimension_numbers<[1], [0], [0], [1], [0, 0, 1, 1], [], []>} : vector<4x64xf32>, vector<64x192xf32>, vector<4x192xf32> -> vector<4x192xf32>
    %c0_47 = arith.constant 0 : index
    %c0_48 = arith.constant 0 : index
    %188 = vector.load %arg3[%c0_47, %c0_48] : memref<1x192xf32, #tpu.memory_space<vmem>>, vector<1x192xf32>
    %189 = vector.broadcast %188 : vector<1x192xf32> to vector<4x192xf32>
    %190 = arith.addf %187, %189 : vector<4x192xf32>
    %191 = arith.index_cast %c2_i32 : i32 to index
    %c0_49 = arith.constant 0 : index
    %c0_50 = arith.constant 0 : index
    %192 = vector.load %arg0[%191, %c0_49, %c0_50] : memref<8x4x192xf32, #tpu.memory_space<vmem>>, vector<1x4x192xf32>
    %193 = vector.shape_cast %192 : vector<1x4x192xf32> to vector<4x192xf32>
    %194 = arith.index_cast %184 : i32 to index
    %c0_51 = arith.constant 0 : index
    %c0_52 = arith.constant 0 : index
    %195 = vector.load %arg0[%194, %c0_51, %c0_52] : memref<8x4x192xf32, #tpu.memory_space<vmem>>, vector<1x4x192xf32>
    %196 = vector.shape_cast %195 : vector<1x4x192xf32> to vector<4x192xf32>
    %197 = vector.extract_strided_slice %193 {offsets = [0, 0], sizes = [4, 32], strides = [1, 1]} : vector<4x192xf32> to vector<4x32xf32>
    %198 = vector.extract_strided_slice %190 {offsets = [0, 0], sizes = [4, 32], strides = [1, 1]} : vector<4x192xf32> to vector<4x32xf32>
    %199 = arith.addf %197, %198 : vector<4x32xf32>
    %200 = arith.negf %199 : vector<4x32xf32>
    %201 = math.exp %200 : vector<4x32xf32>
    %cst_53 = arith.constant 1.000000e+00 : f32
    %202 = vector.broadcast %cst_53 : f32 to vector<4x32xf32>
    %203 = arith.addf %202, %201 : vector<4x32xf32>
    %204 = arith.divf %202, %203 : vector<4x32xf32>
    %205 = vector.extract_strided_slice %193 {offsets = [0, 32], sizes = [4, 32], strides = [1, 1]} : vector<4x192xf32> to vector<4x32xf32>
    %206 = vector.extract_strided_slice %190 {offsets = [0, 32], sizes = [4, 32], strides = [1, 1]} : vector<4x192xf32> to vector<4x32xf32>
    %207 = arith.addf %205, %206 : vector<4x32xf32>
    %208 = arith.negf %207 : vector<4x32xf32>
    %209 = math.exp %208 : vector<4x32xf32>
    %cst_54 = arith.constant 1.000000e+00 : f32
    %210 = vector.broadcast %cst_54 : f32 to vector<4x32xf32>
    %211 = arith.addf %210, %209 : vector<4x32xf32>
    %212 = arith.divf %210, %211 : vector<4x32xf32>
    %213 = vector.extract_strided_slice %193 {offsets = [0, 64], sizes = [4, 32], strides = [1, 1]} : vector<4x192xf32> to vector<4x32xf32>
    %214 = vector.extract_strided_slice %190 {offsets = [0, 64], sizes = [4, 32], strides = [1, 1]} : vector<4x192xf32> to vector<4x32xf32>
    %215 = arith.mulf %204, %214 : vector<4x32xf32>
    %216 = arith.addf %213, %215 : vector<4x32xf32>
    %217 = math.tanh %216 : vector<4x32xf32>
    %cst_55 = arith.constant 1.000000e+00 : f32
    %218 = vector.broadcast %cst_55 : f32 to vector<4x32xf32>
    %219 = arith.subf %218, %212 : vector<4x32xf32>
    %220 = arith.mulf %219, %217 : vector<4x32xf32>
    %221 = arith.mulf %212, %164 : vector<4x32xf32>
    %222 = arith.addf %220, %221 : vector<4x32xf32>
    %223 = vector.extract_strided_slice %196 {offsets = [0, 96], sizes = [4, 32], strides = [1, 1]} : vector<4x192xf32> to vector<4x32xf32>
    %224 = vector.extract_strided_slice %190 {offsets = [0, 96], sizes = [4, 32], strides = [1, 1]} : vector<4x192xf32> to vector<4x32xf32>
    %225 = arith.addf %223, %224 : vector<4x32xf32>
    %226 = arith.negf %225 : vector<4x32xf32>
    %227 = math.exp %226 : vector<4x32xf32>
    %cst_56 = arith.constant 1.000000e+00 : f32
    %228 = vector.broadcast %cst_56 : f32 to vector<4x32xf32>
    %229 = arith.addf %228, %227 : vector<4x32xf32>
    %230 = arith.divf %228, %229 : vector<4x32xf32>
    %231 = vector.extract_strided_slice %196 {offsets = [0, 128], sizes = [4, 32], strides = [1, 1]} : vector<4x192xf32> to vector<4x32xf32>
    %232 = vector.extract_strided_slice %190 {offsets = [0, 128], sizes = [4, 32], strides = [1, 1]} : vector<4x192xf32> to vector<4x32xf32>
    %233 = arith.addf %231, %232 : vector<4x32xf32>
    %234 = arith.negf %233 : vector<4x32xf32>
    %235 = math.exp %234 : vector<4x32xf32>
    %cst_57 = arith.constant 1.000000e+00 : f32
    %236 = vector.broadcast %cst_57 : f32 to vector<4x32xf32>
    %237 = arith.addf %236, %235 : vector<4x32xf32>
    %238 = arith.divf %236, %237 : vector<4x32xf32>
    %239 = vector.extract_strided_slice %196 {offsets = [0, 160], sizes = [4, 32], strides = [1, 1]} : vector<4x192xf32> to vector<4x32xf32>
    %240 = vector.extract_strided_slice %190 {offsets = [0, 160], sizes = [4, 32], strides = [1, 1]} : vector<4x192xf32> to vector<4x32xf32>
    %241 = arith.mulf %230, %240 : vector<4x32xf32>
    %242 = arith.addf %239, %241 : vector<4x32xf32>
    %243 = math.tanh %242 : vector<4x32xf32>
    %cst_58 = arith.constant 1.000000e+00 : f32
    %244 = vector.broadcast %cst_58 : f32 to vector<4x32xf32>
    %245 = arith.subf %244, %238 : vector<4x32xf32>
    %246 = arith.mulf %245, %243 : vector<4x32xf32>
    %247 = arith.mulf %238, %167 : vector<4x32xf32>
    %248 = arith.addf %246, %247 : vector<4x32xf32>
    %249 = vector.broadcast %c2_i32 : i32 to vector<4x1xi32>
    %250 = arith.cmpi sgt, %0, %249 : vector<4x1xi32>
    %251 = vector.broadcast %184 : i32 to vector<4x1xi32>
    %252 = arith.cmpi sgt, %0, %251 : vector<4x1xi32>
    %253 = vector.shape_cast %250 : vector<4x1xi1> to vector<4x1xi1>
    %254 = vector.broadcast %253 : vector<4x1xi1> to vector<4x32xi1>
    %255 = arith.select %254, %222, %164 : vector<4x32xi1>, vector<4x32xf32>
    %256 = vector.shape_cast %252 : vector<4x1xi1> to vector<4x1xi1>
    %257 = vector.broadcast %256 : vector<4x1xi1> to vector<4x32xi1>
    %258 = arith.select %257, %248, %167 : vector<4x32xi1>, vector<4x32xf32>
    %cst_59 = arith.constant 0.000000e+00 : f32
    %259 = vector.shape_cast %250 : vector<4x1xi1> to vector<4x1xi1>
    %260 = vector.broadcast %259 : vector<4x1xi1> to vector<4x32xi1>
    %261 = vector.broadcast %cst_59 : f32 to vector<4x32xf32>
    %262 = arith.select %260, %222, %261 : vector<4x32xi1>, vector<4x32xf32>
    %263 = arith.index_cast %c2_i32 : i32 to index
    %c0_60 = arith.constant 0 : index
    %c0_61 = arith.constant 0 : index
    %264 = vector.load %arg4[%263, %c0_60, %c0_61] : memref<8x4x64xf32, #tpu.memory_space<vmem>>, vector<1x4x32xf32>
    %265 = vector.shape_cast %264 : vector<1x4x32xf32> to vector<4x32xf32>
    %266 = vector.shape_cast %262 : vector<4x32xf32> to vector<1x4x32xf32>
    tpu.vector_store %arg4[%263, %c0_60, %c0_61], %266 {strides = array<i32>} : memref<8x4x64xf32, #tpu.memory_space<vmem>>, vector<1x4x32xf32>,
    %cst_62 = arith.constant 0.000000e+00 : f32
    %267 = vector.shape_cast %252 : vector<4x1xi1> to vector<4x1xi1>
    %268 = vector.broadcast %267 : vector<4x1xi1> to vector<4x32xi1>
    %269 = vector.broadcast %cst_62 : f32 to vector<4x32xf32>
    %270 = arith.select %268, %248, %269 : vector<4x32xi1>, vector<4x32xf32>
    %271 = arith.index_cast %184 : i32 to index
    %c0_63 = arith.constant 0 : index
    %c32_64 = arith.constant 32 : index
    %272 = vector.load %arg4[%271, %c0_63, %c32_64] : memref<8x4x64xf32, #tpu.memory_space<vmem>>, vector<1x4x32xf32>
    %273 = vector.shape_cast %272 : vector<1x4x32xf32> to vector<4x32xf32>
    %274 = vector.shape_cast %270 : vector<4x32xf32> to vector<1x4x32xf32>
    tpu.vector_store %arg4[%271, %c0_63, %c32_64], %274 {strides = array<i32>} : memref<8x4x64xf32, #tpu.memory_space<vmem>>, vector<1x4x32xf32>,
    %c3_i32 = arith.constant 3 : i32
    %c7_i32_65 = arith.constant 7 : i32
    %275 = arith.subi %c7_i32_65, %c3_i32 : i32
    %276 = tpu.concatenate %255, %258 in 1 : vector<4x32xf32>, vector<4x32xf32> -> vector<4x64xf32>
    %c0_66 = arith.constant 0 : index
    %c0_67 = arith.constant 0 : index
    %277 = vector.load %arg2[%c0_66, %c0_67] : memref<64x192xf32, #tpu.memory_space<vmem>>, vector<64x192xf32>
    %cst_68 = arith.constant dense<0.000000e+00> : vector<4x192xf32>
    %278 = tpu.matmul %276, %277, %cst_68 {dimension_numbers = #tpu.dot_dimension_numbers<[1], [0], [0], [1], [0, 0, 1, 1], [], []>} : vector<4x64xf32>, vector<64x192xf32>, vector<4x192xf32> -> vector<4x192xf32>
    %c0_69 = arith.constant 0 : index
    %c0_70 = arith.constant 0 : index
    %279 = vector.load %arg3[%c0_69, %c0_70] : memref<1x192xf32, #tpu.memory_space<vmem>>, vector<1x192xf32>
    %280 = vector.broadcast %279 : vector<1x192xf32> to vector<4x192xf32>
    %281 = arith.addf %278, %280 : vector<4x192xf32>
    %282 = arith.index_cast %c3_i32 : i32 to index
    %c0_71 = arith.constant 0 : index
    %c0_72 = arith.constant 0 : index
    %283 = vector.load %arg0[%282, %c0_71, %c0_72] : memref<8x4x192xf32, #tpu.memory_space<vmem>>, vector<1x4x192xf32>
    %284 = vector.shape_cast %283 : vector<1x4x192xf32> to vector<4x192xf32>
    %285 = arith.index_cast %275 : i32 to index
    %c0_73 = arith.constant 0 : index
    %c0_74 = arith.constant 0 : index
    %286 = vector.load %arg0[%285, %c0_73, %c0_74] : memref<8x4x192xf32, #tpu.memory_space<vmem>>, vector<1x4x192xf32>
    %287 = vector.shape_cast %286 : vector<1x4x192xf32> to vector<4x192xf32>
    %288 = vector.extract_strided_slice %284 {offsets = [0, 0], sizes = [4, 32], strides = [1, 1]} : vector<4x192xf32> to vector<4x32xf32>
    %289 = vector.extract_strided_slice %281 {offsets = [0, 0], sizes = [4, 32], strides = [1, 1]} : vector<4x192xf32> to vector<4x32xf32>
    %290 = arith.addf %288, %289 : vector<4x32xf32>
    %291 = arith.negf %290 : vector<4x32xf32>
    %292 = math.exp %291 : vector<4x32xf32>
    %cst_75 = arith.constant 1.000000e+00 : f32
    %293 = vector.broadcast %cst_75 : f32 to vector<4x32xf32>
    %294 = arith.addf %293, %292 : vector<4x32xf32>
    %295 = arith.divf %293, %294 : vector<4x32xf32>
    %296 = vector.extract_strided_slice %284 {offsets = [0, 32], sizes = [4, 32], strides = [1, 1]} : vector<4x192xf32> to vector<4x32xf32>
    %297 = vector.extract_strided_slice %281 {offsets = [0, 32], sizes = [4, 32], strides = [1, 1]} : vector<4x192xf32> to vector<4x32xf32>
    %298 = arith.addf %296, %297 : vector<4x32xf32>
    %299 = arith.negf %298 : vector<4x32xf32>
    %300 = math.exp %299 : vector<4x32xf32>
    %cst_76 = arith.constant 1.000000e+00 : f32
    %301 = vector.broadcast %cst_76 : f32 to vector<4x32xf32>
    %302 = arith.addf %301, %300 : vector<4x32xf32>
    %303 = arith.divf %301, %302 : vector<4x32xf32>
    %304 = vector.extract_strided_slice %284 {offsets = [0, 64], sizes = [4, 32], strides = [1, 1]} : vector<4x192xf32> to vector<4x32xf32>
    %305 = vector.extract_strided_slice %281 {offsets = [0, 64], sizes = [4, 32], strides = [1, 1]} : vector<4x192xf32> to vector<4x32xf32>
    %306 = arith.mulf %295, %305 : vector<4x32xf32>
    %307 = arith.addf %304, %306 : vector<4x32xf32>
    %308 = math.tanh %307 : vector<4x32xf32>
    %cst_77 = arith.constant 1.000000e+00 : f32
    %309 = vector.broadcast %cst_77 : f32 to vector<4x32xf32>
    %310 = arith.subf %309, %303 : vector<4x32xf32>
    %311 = arith.mulf %310, %308 : vector<4x32xf32>
    %312 = arith.mulf %303, %255 : vector<4x32xf32>
    %313 = arith.addf %311, %312 : vector<4x32xf32>
    %314 = vector.extract_strided_slice %287 {offsets = [0, 96], sizes = [4, 32], strides = [1, 1]} : vector<4x192xf32> to vector<4x32xf32>
    %315 = vector.extract_strided_slice %281 {offsets = [0, 96], sizes = [4, 32], strides = [1, 1]} : vector<4x192xf32> to vector<4x32xf32>
    %316 = arith.addf %314, %315 : vector<4x32xf32>
    %317 = arith.negf %316 : vector<4x32xf32>
    %318 = math.exp %317 : vector<4x32xf32>
    %cst_78 = arith.constant 1.000000e+00 : f32
    %319 = vector.broadcast %cst_78 : f32 to vector<4x32xf32>
    %320 = arith.addf %319, %318 : vector<4x32xf32>
    %321 = arith.divf %319, %320 : vector<4x32xf32>
    %322 = vector.extract_strided_slice %287 {offsets = [0, 128], sizes = [4, 32], strides = [1, 1]} : vector<4x192xf32> to vector<4x32xf32>
    %323 = vector.extract_strided_slice %281 {offsets = [0, 128], sizes = [4, 32], strides = [1, 1]} : vector<4x192xf32> to vector<4x32xf32>
    %324 = arith.addf %322, %323 : vector<4x32xf32>
    %325 = arith.negf %324 : vector<4x32xf32>
    %326 = math.exp %325 : vector<4x32xf32>
    %cst_79 = arith.constant 1.000000e+00 : f32
    %327 = vector.broadcast %cst_79 : f32 to vector<4x32xf32>
    %328 = arith.addf %327, %326 : vector<4x32xf32>
    %329 = arith.divf %327, %328 : vector<4x32xf32>
    %330 = vector.extract_strided_slice %287 {offsets = [0, 160], sizes = [4, 32], strides = [1, 1]} : vector<4x192xf32> to vector<4x32xf32>
    %331 = vector.extract_strided_slice %281 {offsets = [0, 160], sizes = [4, 32], strides = [1, 1]} : vector<4x192xf32> to vector<4x32xf32>
    %332 = arith.mulf %321, %331 : vector<4x32xf32>
    %333 = arith.addf %330, %332 : vector<4x32xf32>
    %334 = math.tanh %333 : vector<4x32xf32>
    %cst_80 = arith.constant 1.000000e+00 : f32
    %335 = vector.broadcast %cst_80 : f32 to vector<4x32xf32>
    %336 = arith.subf %335, %329 : vector<4x32xf32>
    %337 = arith.mulf %336, %334 : vector<4x32xf32>
    %338 = arith.mulf %329, %258 : vector<4x32xf32>
    %339 = arith.addf %337, %338 : vector<4x32xf32>
    %340 = vector.broadcast %c3_i32 : i32 to vector<4x1xi32>
    %341 = arith.cmpi sgt, %0, %340 : vector<4x1xi32>
    %342 = vector.broadcast %275 : i32 to vector<4x1xi32>
    %343 = arith.cmpi sgt, %0, %342 : vector<4x1xi32>
    %344 = vector.shape_cast %341 : vector<4x1xi1> to vector<4x1xi1>
    %345 = vector.broadcast %344 : vector<4x1xi1> to vector<4x32xi1>
    %346 = arith.select %345, %313, %255 : vector<4x32xi1>, vector<4x32xf32>
    %347 = vector.shape_cast %343 : vector<4x1xi1> to vector<4x1xi1>
    %348 = vector.broadcast %347 : vector<4x1xi1> to vector<4x32xi1>
    %349 = arith.select %348, %339, %258 : vector<4x32xi1>, vector<4x32xf32>
    %cst_81 = arith.constant 0.000000e+00 : f32
    %350 = vector.shape_cast %341 : vector<4x1xi1> to vector<4x1xi1>
    %351 = vector.broadcast %350 : vector<4x1xi1> to vector<4x32xi1>
    %352 = vector.broadcast %cst_81 : f32 to vector<4x32xf32>
    %353 = arith.select %351, %313, %352 : vector<4x32xi1>, vector<4x32xf32>
    %354 = arith.index_cast %c3_i32 : i32 to index
    %c0_82 = arith.constant 0 : index
    %c0_83 = arith.constant 0 : index
    %355 = vector.load %arg4[%354, %c0_82, %c0_83] : memref<8x4x64xf32, #tpu.memory_space<vmem>>, vector<1x4x32xf32>
    %356 = vector.shape_cast %355 : vector<1x4x32xf32> to vector<4x32xf32>
    %357 = vector.shape_cast %353 : vector<4x32xf32> to vector<1x4x32xf32>
    tpu.vector_store %arg4[%354, %c0_82, %c0_83], %357 {strides = array<i32>} : memref<8x4x64xf32, #tpu.memory_space<vmem>>, vector<1x4x32xf32>,
    %cst_84 = arith.constant 0.000000e+00 : f32
    %358 = vector.shape_cast %343 : vector<4x1xi1> to vector<4x1xi1>
    %359 = vector.broadcast %358 : vector<4x1xi1> to vector<4x32xi1>
    %360 = vector.broadcast %cst_84 : f32 to vector<4x32xf32>
    %361 = arith.select %359, %339, %360 : vector<4x32xi1>, vector<4x32xf32>
    %362 = arith.index_cast %275 : i32 to index
    %c0_85 = arith.constant 0 : index
    %c32_86 = arith.constant 32 : index
    %363 = vector.load %arg4[%362, %c0_85, %c32_86] : memref<8x4x64xf32, #tpu.memory_space<vmem>>, vector<1x4x32xf32>
    %364 = vector.shape_cast %363 : vector<1x4x32xf32> to vector<4x32xf32>
    %365 = vector.shape_cast %361 : vector<4x32xf32> to vector<1x4x32xf32>
    tpu.vector_store %arg4[%362, %c0_85, %c32_86], %365 {strides = array<i32>} : memref<8x4x64xf32, #tpu.memory_space<vmem>>, vector<1x4x32xf32>,
    %c4_i32 = arith.constant 4 : i32
    %c7_i32_87 = arith.constant 7 : i32
    %366 = arith.subi %c7_i32_87, %c4_i32 : i32
    %367 = tpu.concatenate %346, %349 in 1 : vector<4x32xf32>, vector<4x32xf32> -> vector<4x64xf32>
    %c0_88 = arith.constant 0 : index
    %c0_89 = arith.constant 0 : index
    %368 = vector.load %arg2[%c0_88, %c0_89] : memref<64x192xf32, #tpu.memory_space<vmem>>, vector<64x192xf32>
    %cst_90 = arith.constant dense<0.000000e+00> : vector<4x192xf32>
    %369 = tpu.matmul %367, %368, %cst_90 {dimension_numbers = #tpu.dot_dimension_numbers<[1], [0], [0], [1], [0, 0, 1, 1], [], []>} : vector<4x64xf32>, vector<64x192xf32>, vector<4x192xf32> -> vector<4x192xf32>
    %c0_91 = arith.constant 0 : index
    %c0_92 = arith.constant 0 : index
    %370 = vector.load %arg3[%c0_91, %c0_92] : memref<1x192xf32, #tpu.memory_space<vmem>>, vector<1x192xf32>
    %371 = vector.broadcast %370 : vector<1x192xf32> to vector<4x192xf32>
    %372 = arith.addf %369, %371 : vector<4x192xf32>
    %373 = arith.index_cast %c4_i32 : i32 to index
    %c0_93 = arith.constant 0 : index
    %c0_94 = arith.constant 0 : index
    %374 = vector.load %arg0[%373, %c0_93, %c0_94] : memref<8x4x192xf32, #tpu.memory_space<vmem>>, vector<1x4x192xf32>
    %375 = vector.shape_cast %374 : vector<1x4x192xf32> to vector<4x192xf32>
    %376 = arith.index_cast %366 : i32 to index
    %c0_95 = arith.constant 0 : index
    %c0_96 = arith.constant 0 : index
    %377 = vector.load %arg0[%376, %c0_95, %c0_96] : memref<8x4x192xf32, #tpu.memory_space<vmem>>, vector<1x4x192xf32>
    %378 = vector.shape_cast %377 : vector<1x4x192xf32> to vector<4x192xf32>
    %379 = vector.extract_strided_slice %375 {offsets = [0, 0], sizes = [4, 32], strides = [1, 1]} : vector<4x192xf32> to vector<4x32xf32>
    %380 = vector.extract_strided_slice %372 {offsets = [0, 0], sizes = [4, 32], strides = [1, 1]} : vector<4x192xf32> to vector<4x32xf32>
    %381 = arith.addf %379, %380 : vector<4x32xf32>
    %382 = arith.negf %381 : vector<4x32xf32>
    %383 = math.exp %382 : vector<4x32xf32>
    %cst_97 = arith.constant 1.000000e+00 : f32
    %384 = vector.broadcast %cst_97 : f32 to vector<4x32xf32>
    %385 = arith.addf %384, %383 : vector<4x32xf32>
    %386 = arith.divf %384, %385 : vector<4x32xf32>
    %387 = vector.extract_strided_slice %375 {offsets = [0, 32], sizes = [4, 32], strides = [1, 1]} : vector<4x192xf32> to vector<4x32xf32>
    %388 = vector.extract_strided_slice %372 {offsets = [0, 32], sizes = [4, 32], strides = [1, 1]} : vector<4x192xf32> to vector<4x32xf32>
    %389 = arith.addf %387, %388 : vector<4x32xf32>
    %390 = arith.negf %389 : vector<4x32xf32>
    %391 = math.exp %390 : vector<4x32xf32>
    %cst_98 = arith.constant 1.000000e+00 : f32
    %392 = vector.broadcast %cst_98 : f32 to vector<4x32xf32>
    %393 = arith.addf %392, %391 : vector<4x32xf32>
    %394 = arith.divf %392, %393 : vector<4x32xf32>
    %395 = vector.extract_strided_slice %375 {offsets = [0, 64], sizes = [4, 32], strides = [1, 1]} : vector<4x192xf32> to vector<4x32xf32>
    %396 = vector.extract_strided_slice %372 {offsets = [0, 64], sizes = [4, 32], strides = [1, 1]} : vector<4x192xf32> to vector<4x32xf32>
    %397 = arith.mulf %386, %396 : vector<4x32xf32>
    %398 = arith.addf %395, %397 : vector<4x32xf32>
    %399 = math.tanh %398 : vector<4x32xf32>
    %cst_99 = arith.constant 1.000000e+00 : f32
    %400 = vector.broadcast %cst_99 : f32 to vector<4x32xf32>
    %401 = arith.subf %400, %394 : vector<4x32xf32>
    %402 = arith.mulf %401, %399 : vector<4x32xf32>
    %403 = arith.mulf %394, %346 : vector<4x32xf32>
    %404 = arith.addf %402, %403 : vector<4x32xf32>
    %405 = vector.extract_strided_slice %378 {offsets = [0, 96], sizes = [4, 32], strides = [1, 1]} : vector<4x192xf32> to vector<4x32xf32>
    %406 = vector.extract_strided_slice %372 {offsets = [0, 96], sizes = [4, 32], strides = [1, 1]} : vector<4x192xf32> to vector<4x32xf32>
    %407 = arith.addf %405, %406 : vector<4x32xf32>
    %408 = arith.negf %407 : vector<4x32xf32>
    %409 = math.exp %408 : vector<4x32xf32>
    %cst_100 = arith.constant 1.000000e+00 : f32
    %410 = vector.broadcast %cst_100 : f32 to vector<4x32xf32>
    %411 = arith.addf %410, %409 : vector<4x32xf32>
    %412 = arith.divf %410, %411 : vector<4x32xf32>
    %413 = vector.extract_strided_slice %378 {offsets = [0, 128], sizes = [4, 32], strides = [1, 1]} : vector<4x192xf32> to vector<4x32xf32>
    %414 = vector.extract_strided_slice %372 {offsets = [0, 128], sizes = [4, 32], strides = [1, 1]} : vector<4x192xf32> to vector<4x32xf32>
    %415 = arith.addf %413, %414 : vector<4x32xf32>
    %416 = arith.negf %415 : vector<4x32xf32>
    %417 = math.exp %416 : vector<4x32xf32>
    %cst_101 = arith.constant 1.000000e+00 : f32
    %418 = vector.broadcast %cst_101 : f32 to vector<4x32xf32>
    %419 = arith.addf %418, %417 : vector<4x32xf32>
    %420 = arith.divf %418, %419 : vector<4x32xf32>
    %421 = vector.extract_strided_slice %378 {offsets = [0, 160], sizes = [4, 32], strides = [1, 1]} : vector<4x192xf32> to vector<4x32xf32>
    %422 = vector.extract_strided_slice %372 {offsets = [0, 160], sizes = [4, 32], strides = [1, 1]} : vector<4x192xf32> to vector<4x32xf32>
    %423 = arith.mulf %412, %422 : vector<4x32xf32>
    %424 = arith.addf %421, %423 : vector<4x32xf32>
    %425 = math.tanh %424 : vector<4x32xf32>
    %cst_102 = arith.constant 1.000000e+00 : f32
    %426 = vector.broadcast %cst_102 : f32 to vector<4x32xf32>
    %427 = arith.subf %426, %420 : vector<4x32xf32>
    %428 = arith.mulf %427, %425 : vector<4x32xf32>
    %429 = arith.mulf %420, %349 : vector<4x32xf32>
    %430 = arith.addf %428, %429 : vector<4x32xf32>
    %431 = vector.broadcast %c4_i32 : i32 to vector<4x1xi32>
    %432 = arith.cmpi sgt, %0, %431 : vector<4x1xi32>
    %433 = vector.broadcast %366 : i32 to vector<4x1xi32>
    %434 = arith.cmpi sgt, %0, %433 : vector<4x1xi32>
    %435 = vector.shape_cast %432 : vector<4x1xi1> to vector<4x1xi1>
    %436 = vector.broadcast %435 : vector<4x1xi1> to vector<4x32xi1>
    %437 = arith.select %436, %404, %346 : vector<4x32xi1>, vector<4x32xf32>
    %438 = vector.shape_cast %434 : vector<4x1xi1> to vector<4x1xi1>
    %439 = vector.broadcast %438 : vector<4x1xi1> to vector<4x32xi1>
    %440 = arith.select %439, %430, %349 : vector<4x32xi1>, vector<4x32xf32>
    %cst_103 = arith.constant 0.000000e+00 : f32
    %441 = vector.shape_cast %432 : vector<4x1xi1> to vector<4x1xi1>
    %442 = vector.broadcast %441 : vector<4x1xi1> to vector<4x32xi1>
    %443 = vector.broadcast %cst_103 : f32 to vector<4x32xf32>
    %444 = arith.select %442, %404, %443 : vector<4x32xi1>, vector<4x32xf32>
    %445 = arith.index_cast %c4_i32 : i32 to index
    %c0_104 = arith.constant 0 : index
    %c0_105 = arith.constant 0 : index
    %446 = vector.load %arg4[%445, %c0_104, %c0_105] : memref<8x4x64xf32, #tpu.memory_space<vmem>>, vector<1x4x32xf32>
    %447 = vector.shape_cast %446 : vector<1x4x32xf32> to vector<4x32xf32>
    %448 = vector.shape_cast %444 : vector<4x32xf32> to vector<1x4x32xf32>
    tpu.vector_store %arg4[%445, %c0_104, %c0_105], %448 {strides = array<i32>} : memref<8x4x64xf32, #tpu.memory_space<vmem>>, vector<1x4x32xf32>,
    %cst_106 = arith.constant 0.000000e+00 : f32
    %449 = vector.shape_cast %434 : vector<4x1xi1> to vector<4x1xi1>
    %450 = vector.broadcast %449 : vector<4x1xi1> to vector<4x32xi1>
    %451 = vector.broadcast %cst_106 : f32 to vector<4x32xf32>
    %452 = arith.select %450, %430, %451 : vector<4x32xi1>, vector<4x32xf32>
    %453 = arith.index_cast %366 : i32 to index
    %c0_107 = arith.constant 0 : index
    %c32_108 = arith.constant 32 : index
    %454 = vector.load %arg4[%453, %c0_107, %c32_108] : memref<8x4x64xf32, #tpu.memory_space<vmem>>, vector<1x4x32xf32>
    %455 = vector.shape_cast %454 : vector<1x4x32xf32> to vector<4x32xf32>
    %456 = vector.shape_cast %452 : vector<4x32xf32> to vector<1x4x32xf32>
    tpu.vector_store %arg4[%453, %c0_107, %c32_108], %456 {strides = array<i32>} : memref<8x4x64xf32, #tpu.memory_space<vmem>>, vector<1x4x32xf32>,
    %c5_i32 = arith.constant 5 : i32
    %c7_i32_109 = arith.constant 7 : i32
    %457 = arith.subi %c7_i32_109, %c5_i32 : i32
    %458 = tpu.concatenate %437, %440 in 1 : vector<4x32xf32>, vector<4x32xf32> -> vector<4x64xf32>
    %c0_110 = arith.constant 0 : index
    %c0_111 = arith.constant 0 : index
    %459 = vector.load %arg2[%c0_110, %c0_111] : memref<64x192xf32, #tpu.memory_space<vmem>>, vector<64x192xf32>
    %cst_112 = arith.constant dense<0.000000e+00> : vector<4x192xf32>
    %460 = tpu.matmul %458, %459, %cst_112 {dimension_numbers = #tpu.dot_dimension_numbers<[1], [0], [0], [1], [0, 0, 1, 1], [], []>} : vector<4x64xf32>, vector<64x192xf32>, vector<4x192xf32> -> vector<4x192xf32>
    %c0_113 = arith.constant 0 : index
    %c0_114 = arith.constant 0 : index
    %461 = vector.load %arg3[%c0_113, %c0_114] : memref<1x192xf32, #tpu.memory_space<vmem>>, vector<1x192xf32>
    %462 = vector.broadcast %461 : vector<1x192xf32> to vector<4x192xf32>
    %463 = arith.addf %460, %462 : vector<4x192xf32>
    %464 = arith.index_cast %c5_i32 : i32 to index
    %c0_115 = arith.constant 0 : index
    %c0_116 = arith.constant 0 : index
    %465 = vector.load %arg0[%464, %c0_115, %c0_116] : memref<8x4x192xf32, #tpu.memory_space<vmem>>, vector<1x4x192xf32>
    %466 = vector.shape_cast %465 : vector<1x4x192xf32> to vector<4x192xf32>
    %467 = arith.index_cast %457 : i32 to index
    %c0_117 = arith.constant 0 : index
    %c0_118 = arith.constant 0 : index
    %468 = vector.load %arg0[%467, %c0_117, %c0_118] : memref<8x4x192xf32, #tpu.memory_space<vmem>>, vector<1x4x192xf32>
    %469 = vector.shape_cast %468 : vector<1x4x192xf32> to vector<4x192xf32>
    %470 = vector.extract_strided_slice %466 {offsets = [0, 0], sizes = [4, 32], strides = [1, 1]} : vector<4x192xf32> to vector<4x32xf32>
    %471 = vector.extract_strided_slice %463 {offsets = [0, 0], sizes = [4, 32], strides = [1, 1]} : vector<4x192xf32> to vector<4x32xf32>
    %472 = arith.addf %470, %471 : vector<4x32xf32>
    %473 = arith.negf %472 : vector<4x32xf32>
    %474 = math.exp %473 : vector<4x32xf32>
    %cst_119 = arith.constant 1.000000e+00 : f32
    %475 = vector.broadcast %cst_119 : f32 to vector<4x32xf32>
    %476 = arith.addf %475, %474 : vector<4x32xf32>
    %477 = arith.divf %475, %476 : vector<4x32xf32>
    %478 = vector.extract_strided_slice %466 {offsets = [0, 32], sizes = [4, 32], strides = [1, 1]} : vector<4x192xf32> to vector<4x32xf32>
    %479 = vector.extract_strided_slice %463 {offsets = [0, 32], sizes = [4, 32], strides = [1, 1]} : vector<4x192xf32> to vector<4x32xf32>
    %480 = arith.addf %478, %479 : vector<4x32xf32>
    %481 = arith.negf %480 : vector<4x32xf32>
    %482 = math.exp %481 : vector<4x32xf32>
    %cst_120 = arith.constant 1.000000e+00 : f32
    %483 = vector.broadcast %cst_120 : f32 to vector<4x32xf32>
    %484 = arith.addf %483, %482 : vector<4x32xf32>
    %485 = arith.divf %483, %484 : vector<4x32xf32>
    %486 = vector.extract_strided_slice %466 {offsets = [0, 64], sizes = [4, 32], strides = [1, 1]} : vector<4x192xf32> to vector<4x32xf32>
    %487 = vector.extract_strided_slice %463 {offsets = [0, 64], sizes = [4, 32], strides = [1, 1]} : vector<4x192xf32> to vector<4x32xf32>
    %488 = arith.mulf %477, %487 : vector<4x32xf32>
    %489 = arith.addf %486, %488 : vector<4x32xf32>
    %490 = math.tanh %489 : vector<4x32xf32>
    %cst_121 = arith.constant 1.000000e+00 : f32
    %491 = vector.broadcast %cst_121 : f32 to vector<4x32xf32>
    %492 = arith.subf %491, %485 : vector<4x32xf32>
    %493 = arith.mulf %492, %490 : vector<4x32xf32>
    %494 = arith.mulf %485, %437 : vector<4x32xf32>
    %495 = arith.addf %493, %494 : vector<4x32xf32>
    %496 = vector.extract_strided_slice %469 {offsets = [0, 96], sizes = [4, 32], strides = [1, 1]} : vector<4x192xf32> to vector<4x32xf32>
    %497 = vector.extract_strided_slice %463 {offsets = [0, 96], sizes = [4, 32], strides = [1, 1]} : vector<4x192xf32> to vector<4x32xf32>
    %498 = arith.addf %496, %497 : vector<4x32xf32>
    %499 = arith.negf %498 : vector<4x32xf32>
    %500 = math.exp %499 : vector<4x32xf32>
    %cst_122 = arith.constant 1.000000e+00 : f32
    %501 = vector.broadcast %cst_122 : f32 to vector<4x32xf32>
    %502 = arith.addf %501, %500 : vector<4x32xf32>
    %503 = arith.divf %501, %502 : vector<4x32xf32>
    %504 = vector.extract_strided_slice %469 {offsets = [0, 128], sizes = [4, 32], strides = [1, 1]} : vector<4x192xf32> to vector<4x32xf32>
    %505 = vector.extract_strided_slice %463 {offsets = [0, 128], sizes = [4, 32], strides = [1, 1]} : vector<4x192xf32> to vector<4x32xf32>
    %506 = arith.addf %504, %505 : vector<4x32xf32>
    %507 = arith.negf %506 : vector<4x32xf32>
    %508 = math.exp %507 : vector<4x32xf32>
    %cst_123 = arith.constant 1.000000e+00 : f32
    %509 = vector.broadcast %cst_123 : f32 to vector<4x32xf32>
    %510 = arith.addf %509, %508 : vector<4x32xf32>
    %511 = arith.divf %509, %510 : vector<4x32xf32>
    %512 = vector.extract_strided_slice %469 {offsets = [0, 160], sizes = [4, 32], strides = [1, 1]} : vector<4x192xf32> to vector<4x32xf32>
    %513 = vector.extract_strided_slice %463 {offsets = [0, 160], sizes = [4, 32], strides = [1, 1]} : vector<4x192xf32> to vector<4x32xf32>
    %514 = arith.mulf %503, %513 : vector<4x32xf32>
    %515 = arith.addf %512, %514 : vector<4x32xf32>
    %516 = math.tanh %515 : vector<4x32xf32>
    %cst_124 = arith.constant 1.000000e+00 : f32
    %517 = vector.broadcast %cst_124 : f32 to vector<4x32xf32>
    %518 = arith.subf %517, %511 : vector<4x32xf32>
    %519 = arith.mulf %518, %516 : vector<4x32xf32>
    %520 = arith.mulf %511, %440 : vector<4x32xf32>
    %521 = arith.addf %519, %520 : vector<4x32xf32>
    %522 = vector.broadcast %c5_i32 : i32 to vector<4x1xi32>
    %523 = arith.cmpi sgt, %0, %522 : vector<4x1xi32>
    %524 = vector.broadcast %457 : i32 to vector<4x1xi32>
    %525 = arith.cmpi sgt, %0, %524 : vector<4x1xi32>
    %526 = vector.shape_cast %523 : vector<4x1xi1> to vector<4x1xi1>
    %527 = vector.broadcast %526 : vector<4x1xi1> to vector<4x32xi1>
    %528 = arith.select %527, %495, %437 : vector<4x32xi1>, vector<4x32xf32>
    %529 = vector.shape_cast %525 : vector<4x1xi1> to vector<4x1xi1>
    %530 = vector.broadcast %529 : vector<4x1xi1> to vector<4x32xi1>
    %531 = arith.select %530, %521, %440 : vector<4x32xi1>, vector<4x32xf32>
    %cst_125 = arith.constant 0.000000e+00 : f32
    %532 = vector.shape_cast %523 : vector<4x1xi1> to vector<4x1xi1>
    %533 = vector.broadcast %532 : vector<4x1xi1> to vector<4x32xi1>
    %534 = vector.broadcast %cst_125 : f32 to vector<4x32xf32>
    %535 = arith.select %533, %495, %534 : vector<4x32xi1>, vector<4x32xf32>
    %536 = arith.index_cast %c5_i32 : i32 to index
    %c0_126 = arith.constant 0 : index
    %c0_127 = arith.constant 0 : index
    %537 = vector.load %arg4[%536, %c0_126, %c0_127] : memref<8x4x64xf32, #tpu.memory_space<vmem>>, vector<1x4x32xf32>
    %538 = vector.shape_cast %537 : vector<1x4x32xf32> to vector<4x32xf32>
    %539 = vector.shape_cast %535 : vector<4x32xf32> to vector<1x4x32xf32>
    tpu.vector_store %arg4[%536, %c0_126, %c0_127], %539 {strides = array<i32>} : memref<8x4x64xf32, #tpu.memory_space<vmem>>, vector<1x4x32xf32>,
    %cst_128 = arith.constant 0.000000e+00 : f32
    %540 = vector.shape_cast %525 : vector<4x1xi1> to vector<4x1xi1>
    %541 = vector.broadcast %540 : vector<4x1xi1> to vector<4x32xi1>
    %542 = vector.broadcast %cst_128 : f32 to vector<4x32xf32>
    %543 = arith.select %541, %521, %542 : vector<4x32xi1>, vector<4x32xf32>
    %544 = arith.index_cast %457 : i32 to index
    %c0_129 = arith.constant 0 : index
    %c32_130 = arith.constant 32 : index
    %545 = vector.load %arg4[%544, %c0_129, %c32_130] : memref<8x4x64xf32, #tpu.memory_space<vmem>>, vector<1x4x32xf32>
    %546 = vector.shape_cast %545 : vector<1x4x32xf32> to vector<4x32xf32>
    %547 = vector.shape_cast %543 : vector<4x32xf32> to vector<1x4x32xf32>
    tpu.vector_store %arg4[%544, %c0_129, %c32_130], %547 {strides = array<i32>} : memref<8x4x64xf32, #tpu.memory_space<vmem>>, vector<1x4x32xf32>,
    %c6_i32 = arith.constant 6 : i32
    %c7_i32_131 = arith.constant 7 : i32
    %548 = arith.subi %c7_i32_131, %c6_i32 : i32
    %549 = tpu.concatenate %528, %531 in 1 : vector<4x32xf32>, vector<4x32xf32> -> vector<4x64xf32>
    %c0_132 = arith.constant 0 : index
    %c0_133 = arith.constant 0 : index
    %550 = vector.load %arg2[%c0_132, %c0_133] : memref<64x192xf32, #tpu.memory_space<vmem>>, vector<64x192xf32>
    %cst_134 = arith.constant dense<0.000000e+00> : vector<4x192xf32>
    %551 = tpu.matmul %549, %550, %cst_134 {dimension_numbers = #tpu.dot_dimension_numbers<[1], [0], [0], [1], [0, 0, 1, 1], [], []>} : vector<4x64xf32>, vector<64x192xf32>, vector<4x192xf32> -> vector<4x192xf32>
    %c0_135 = arith.constant 0 : index
    %c0_136 = arith.constant 0 : index
    %552 = vector.load %arg3[%c0_135, %c0_136] : memref<1x192xf32, #tpu.memory_space<vmem>>, vector<1x192xf32>
    %553 = vector.broadcast %552 : vector<1x192xf32> to vector<4x192xf32>
    %554 = arith.addf %551, %553 : vector<4x192xf32>
    %555 = arith.index_cast %c6_i32 : i32 to index
    %c0_137 = arith.constant 0 : index
    %c0_138 = arith.constant 0 : index
    %556 = vector.load %arg0[%555, %c0_137, %c0_138] : memref<8x4x192xf32, #tpu.memory_space<vmem>>, vector<1x4x192xf32>
    %557 = vector.shape_cast %556 : vector<1x4x192xf32> to vector<4x192xf32>
    %558 = arith.index_cast %548 : i32 to index
    %c0_139 = arith.constant 0 : index
    %c0_140 = arith.constant 0 : index
    %559 = vector.load %arg0[%558, %c0_139, %c0_140] : memref<8x4x192xf32, #tpu.memory_space<vmem>>, vector<1x4x192xf32>
    %560 = vector.shape_cast %559 : vector<1x4x192xf32> to vector<4x192xf32>
    %561 = vector.extract_strided_slice %557 {offsets = [0, 0], sizes = [4, 32], strides = [1, 1]} : vector<4x192xf32> to vector<4x32xf32>
    %562 = vector.extract_strided_slice %554 {offsets = [0, 0], sizes = [4, 32], strides = [1, 1]} : vector<4x192xf32> to vector<4x32xf32>
    %563 = arith.addf %561, %562 : vector<4x32xf32>
    %564 = arith.negf %563 : vector<4x32xf32>
    %565 = math.exp %564 : vector<4x32xf32>
    %cst_141 = arith.constant 1.000000e+00 : f32
    %566 = vector.broadcast %cst_141 : f32 to vector<4x32xf32>
    %567 = arith.addf %566, %565 : vector<4x32xf32>
    %568 = arith.divf %566, %567 : vector<4x32xf32>
    %569 = vector.extract_strided_slice %557 {offsets = [0, 32], sizes = [4, 32], strides = [1, 1]} : vector<4x192xf32> to vector<4x32xf32>
    %570 = vector.extract_strided_slice %554 {offsets = [0, 32], sizes = [4, 32], strides = [1, 1]} : vector<4x192xf32> to vector<4x32xf32>
    %571 = arith.addf %569, %570 : vector<4x32xf32>
    %572 = arith.negf %571 : vector<4x32xf32>
    %573 = math.exp %572 : vector<4x32xf32>
    %cst_142 = arith.constant 1.000000e+00 : f32
    %574 = vector.broadcast %cst_142 : f32 to vector<4x32xf32>
    %575 = arith.addf %574, %573 : vector<4x32xf32>
    %576 = arith.divf %574, %575 : vector<4x32xf32>
    %577 = vector.extract_strided_slice %557 {offsets = [0, 64], sizes = [4, 32], strides = [1, 1]} : vector<4x192xf32> to vector<4x32xf32>
    %578 = vector.extract_strided_slice %554 {offsets = [0, 64], sizes = [4, 32], strides = [1, 1]} : vector<4x192xf32> to vector<4x32xf32>
    %579 = arith.mulf %568, %578 : vector<4x32xf32>
    %580 = arith.addf %577, %579 : vector<4x32xf32>
    %581 = math.tanh %580 : vector<4x32xf32>
    %cst_143 = arith.constant 1.000000e+00 : f32
    %582 = vector.broadcast %cst_143 : f32 to vector<4x32xf32>
    %583 = arith.subf %582, %576 : vector<4x32xf32>
    %584 = arith.mulf %583, %581 : vector<4x32xf32>
    %585 = arith.mulf %576, %528 : vector<4x32xf32>
    %586 = arith.addf %584, %585 : vector<4x32xf32>
    %587 = vector.extract_strided_slice %560 {offsets = [0, 96], sizes = [4, 32], strides = [1, 1]} : vector<4x192xf32> to vector<4x32xf32>
    %588 = vector.extract_strided_slice %554 {offsets = [0, 96], sizes = [4, 32], strides = [1, 1]} : vector<4x192xf32> to vector<4x32xf32>
    %589 = arith.addf %587, %588 : vector<4x32xf32>
    %590 = arith.negf %589 : vector<4x32xf32>
    %591 = math.exp %590 : vector<4x32xf32>
    %cst_144 = arith.constant 1.000000e+00 : f32
    %592 = vector.broadcast %cst_144 : f32 to vector<4x32xf32>
    %593 = arith.addf %592, %591 : vector<4x32xf32>
    %594 = arith.divf %592, %593 : vector<4x32xf32>
    %595 = vector.extract_strided_slice %560 {offsets = [0, 128], sizes = [4, 32], strides = [1, 1]} : vector<4x192xf32> to vector<4x32xf32>
    %596 = vector.extract_strided_slice %554 {offsets = [0, 128], sizes = [4, 32], strides = [1, 1]} : vector<4x192xf32> to vector<4x32xf32>
    %597 = arith.addf %595, %596 : vector<4x32xf32>
    %598 = arith.negf %597 : vector<4x32xf32>
    %599 = math.exp %598 : vector<4x32xf32>
    %cst_145 = arith.constant 1.000000e+00 : f32
    %600 = vector.broadcast %cst_145 : f32 to vector<4x32xf32>
    %601 = arith.addf %600, %599 : vector<4x32xf32>
    %602 = arith.divf %600, %601 : vector<4x32xf32>
    %603 = vector.extract_strided_slice %560 {offsets = [0, 160], sizes = [4, 32], strides = [1, 1]} : vector<4x192xf32> to vector<4x32xf32>
    %604 = vector.extract_strided_slice %554 {offsets = [0, 160], sizes = [4, 32], strides = [1, 1]} : vector<4x192xf32> to vector<4x32xf32>
    %605 = arith.mulf %594, %604 : vector<4x32xf32>
    %606 = arith.addf %603, %605 : vector<4x32xf32>
    %607 = math.tanh %606 : vector<4x32xf32>
    %cst_146 = arith.constant 1.000000e+00 : f32
    %608 = vector.broadcast %cst_146 : f32 to vector<4x32xf32>
    %609 = arith.subf %608, %602 : vector<4x32xf32>
    %610 = arith.mulf %609, %607 : vector<4x32xf32>
    %611 = arith.mulf %602, %531 : vector<4x32xf32>
    %612 = arith.addf %610, %611 : vector<4x32xf32>
    %613 = vector.broadcast %c6_i32 : i32 to vector<4x1xi32>
    %614 = arith.cmpi sgt, %0, %613 : vector<4x1xi32>
    %615 = vector.broadcast %548 : i32 to vector<4x1xi32>
    %616 = arith.cmpi sgt, %0, %615 : vector<4x1xi32>
    %617 = vector.shape_cast %614 : vector<4x1xi1> to vector<4x1xi1>
    %618 = vector.broadcast %617 : vector<4x1xi1> to vector<4x32xi1>
    %619 = arith.select %618, %586, %528 : vector<4x32xi1>, vector<4x32xf32>
    %620 = vector.shape_cast %616 : vector<4x1xi1> to vector<4x1xi1>
    %621 = vector.broadcast %620 : vector<4x1xi1> to vector<4x32xi1>
    %622 = arith.select %621, %612, %531 : vector<4x32xi1>, vector<4x32xf32>
    %cst_147 = arith.constant 0.000000e+00 : f32
    %623 = vector.shape_cast %614 : vector<4x1xi1> to vector<4x1xi1>
    %624 = vector.broadcast %623 : vector<4x1xi1> to vector<4x32xi1>
    %625 = vector.broadcast %cst_147 : f32 to vector<4x32xf32>
    %626 = arith.select %624, %586, %625 : vector<4x32xi1>, vector<4x32xf32>
    %627 = arith.index_cast %c6_i32 : i32 to index
    %c0_148 = arith.constant 0 : index
    %c0_149 = arith.constant 0 : index
    %628 = vector.load %arg4[%627, %c0_148, %c0_149] : memref<8x4x64xf32, #tpu.memory_space<vmem>>, vector<1x4x32xf32>
    %629 = vector.shape_cast %628 : vector<1x4x32xf32> to vector<4x32xf32>
    %630 = vector.shape_cast %626 : vector<4x32xf32> to vector<1x4x32xf32>
    tpu.vector_store %arg4[%627, %c0_148, %c0_149], %630 {strides = array<i32>} : memref<8x4x64xf32, #tpu.memory_space<vmem>>, vector<1x4x32xf32>,
    %cst_150 = arith.constant 0.000000e+00 : f32
    %631 = vector.shape_cast %616 : vector<4x1xi1> to vector<4x1xi1>
    %632 = vector.broadcast %631 : vector<4x1xi1> to vector<4x32xi1>
    %633 = vector.broadcast %cst_150 : f32 to vector<4x32xf32>
    %634 = arith.select %632, %612, %633 : vector<4x32xi1>, vector<4x32xf32>
    %635 = arith.index_cast %548 : i32 to index
    %c0_151 = arith.constant 0 : index
    %c32_152 = arith.constant 32 : index
    %636 = vector.load %arg4[%635, %c0_151, %c32_152] : memref<8x4x64xf32, #tpu.memory_space<vmem>>, vector<1x4x32xf32>
    %637 = vector.shape_cast %636 : vector<1x4x32xf32> to vector<4x32xf32>
    %638 = vector.shape_cast %634 : vector<4x32xf32> to vector<1x4x32xf32>
    tpu.vector_store %arg4[%635, %c0_151, %c32_152], %638 {strides = array<i32>} : memref<8x4x64xf32, #tpu.memory_space<vmem>>, vector<1x4x32xf32>,
    %c7_i32_153 = arith.constant 7 : i32
    %c7_i32_154 = arith.constant 7 : i32
    %639 = arith.subi %c7_i32_154, %c7_i32_153 : i32
    %640 = tpu.concatenate %619, %622 in 1 : vector<4x32xf32>, vector<4x32xf32> -> vector<4x64xf32>
    %c0_155 = arith.constant 0 : index
    %c0_156 = arith.constant 0 : index
    %641 = vector.load %arg2[%c0_155, %c0_156] : memref<64x192xf32, #tpu.memory_space<vmem>>, vector<64x192xf32>
    %cst_157 = arith.constant dense<0.000000e+00> : vector<4x192xf32>
    %642 = tpu.matmul %640, %641, %cst_157 {dimension_numbers = #tpu.dot_dimension_numbers<[1], [0], [0], [1], [0, 0, 1, 1], [], []>} : vector<4x64xf32>, vector<64x192xf32>, vector<4x192xf32> -> vector<4x192xf32>
    %c0_158 = arith.constant 0 : index
    %c0_159 = arith.constant 0 : index
    %643 = vector.load %arg3[%c0_158, %c0_159] : memref<1x192xf32, #tpu.memory_space<vmem>>, vector<1x192xf32>
    %644 = vector.broadcast %643 : vector<1x192xf32> to vector<4x192xf32>
    %645 = arith.addf %642, %644 : vector<4x192xf32>
    %646 = arith.index_cast %c7_i32_153 : i32 to index
    %c0_160 = arith.constant 0 : index
    %c0_161 = arith.constant 0 : index
    %647 = vector.load %arg0[%646, %c0_160, %c0_161] : memref<8x4x192xf32, #tpu.memory_space<vmem>>, vector<1x4x192xf32>
    %648 = vector.shape_cast %647 : vector<1x4x192xf32> to vector<4x192xf32>
    %649 = arith.index_cast %639 : i32 to index
    %c0_162 = arith.constant 0 : index
    %c0_163 = arith.constant 0 : index
    %650 = vector.load %arg0[%649, %c0_162, %c0_163] : memref<8x4x192xf32, #tpu.memory_space<vmem>>, vector<1x4x192xf32>
    %651 = vector.shape_cast %650 : vector<1x4x192xf32> to vector<4x192xf32>
    %652 = vector.extract_strided_slice %648 {offsets = [0, 0], sizes = [4, 32], strides = [1, 1]} : vector<4x192xf32> to vector<4x32xf32>
    %653 = vector.extract_strided_slice %645 {offsets = [0, 0], sizes = [4, 32], strides = [1, 1]} : vector<4x192xf32> to vector<4x32xf32>
    %654 = arith.addf %652, %653 : vector<4x32xf32>
    %655 = arith.negf %654 : vector<4x32xf32>
    %656 = math.exp %655 : vector<4x32xf32>
    %cst_164 = arith.constant 1.000000e+00 : f32
    %657 = vector.broadcast %cst_164 : f32 to vector<4x32xf32>
    %658 = arith.addf %657, %656 : vector<4x32xf32>
    %659 = arith.divf %657, %658 : vector<4x32xf32>
    %660 = vector.extract_strided_slice %648 {offsets = [0, 32], sizes = [4, 32], strides = [1, 1]} : vector<4x192xf32> to vector<4x32xf32>
    %661 = vector.extract_strided_slice %645 {offsets = [0, 32], sizes = [4, 32], strides = [1, 1]} : vector<4x192xf32> to vector<4x32xf32>
    %662 = arith.addf %660, %661 : vector<4x32xf32>
    %663 = arith.negf %662 : vector<4x32xf32>
    %664 = math.exp %663 : vector<4x32xf32>
    %cst_165 = arith.constant 1.000000e+00 : f32
    %665 = vector.broadcast %cst_165 : f32 to vector<4x32xf32>
    %666 = arith.addf %665, %664 : vector<4x32xf32>
    %667 = arith.divf %665, %666 : vector<4x32xf32>
    %668 = vector.extract_strided_slice %648 {offsets = [0, 64], sizes = [4, 32], strides = [1, 1]} : vector<4x192xf32> to vector<4x32xf32>
    %669 = vector.extract_strided_slice %645 {offsets = [0, 64], sizes = [4, 32], strides = [1, 1]} : vector<4x192xf32> to vector<4x32xf32>
    %670 = arith.mulf %659, %669 : vector<4x32xf32>
    %671 = arith.addf %668, %670 : vector<4x32xf32>
    %672 = math.tanh %671 : vector<4x32xf32>
    %cst_166 = arith.constant 1.000000e+00 : f32
    %673 = vector.broadcast %cst_166 : f32 to vector<4x32xf32>
    %674 = arith.subf %673, %667 : vector<4x32xf32>
    %675 = arith.mulf %674, %672 : vector<4x32xf32>
    %676 = arith.mulf %667, %619 : vector<4x32xf32>
    %677 = arith.addf %675, %676 : vector<4x32xf32>
    %678 = vector.extract_strided_slice %651 {offsets = [0, 96], sizes = [4, 32], strides = [1, 1]} : vector<4x192xf32> to vector<4x32xf32>
    %679 = vector.extract_strided_slice %645 {offsets = [0, 96], sizes = [4, 32], strides = [1, 1]} : vector<4x192xf32> to vector<4x32xf32>
    %680 = arith.addf %678, %679 : vector<4x32xf32>
    %681 = arith.negf %680 : vector<4x32xf32>
    %682 = math.exp %681 : vector<4x32xf32>
    %cst_167 = arith.constant 1.000000e+00 : f32
    %683 = vector.broadcast %cst_167 : f32 to vector<4x32xf32>
    %684 = arith.addf %683, %682 : vector<4x32xf32>
    %685 = arith.divf %683, %684 : vector<4x32xf32>
    %686 = vector.extract_strided_slice %651 {offsets = [0, 128], sizes = [4, 32], strides = [1, 1]} : vector<4x192xf32> to vector<4x32xf32>
    %687 = vector.extract_strided_slice %645 {offsets = [0, 128], sizes = [4, 32], strides = [1, 1]} : vector<4x192xf32> to vector<4x32xf32>
    %688 = arith.addf %686, %687 : vector<4x32xf32>
    %689 = arith.negf %688 : vector<4x32xf32>
    %690 = math.exp %689 : vector<4x32xf32>
    %cst_168 = arith.constant 1.000000e+00 : f32
    %691 = vector.broadcast %cst_168 : f32 to vector<4x32xf32>
    %692 = arith.addf %691, %690 : vector<4x32xf32>
    %693 = arith.divf %691, %692 : vector<4x32xf32>
    %694 = vector.extract_strided_slice %651 {offsets = [0, 160], sizes = [4, 32], strides = [1, 1]} : vector<4x192xf32> to vector<4x32xf32>
    %695 = vector.extract_strided_slice %645 {offsets = [0, 160], sizes = [4, 32], strides = [1, 1]} : vector<4x192xf32> to vector<4x32xf32>
    %696 = arith.mulf %685, %695 : vector<4x32xf32>
    %697 = arith.addf %694, %696 : vector<4x32xf32>
    %698 = math.tanh %697 : vector<4x32xf32>
    %cst_169 = arith.constant 1.000000e+00 : f32
    %699 = vector.broadcast %cst_169 : f32 to vector<4x32xf32>
    %700 = arith.subf %699, %693 : vector<4x32xf32>
    %701 = arith.mulf %700, %698 : vector<4x32xf32>
    %702 = arith.mulf %693, %622 : vector<4x32xf32>
    %703 = arith.addf %701, %702 : vector<4x32xf32>
    %704 = vector.broadcast %c7_i32_153 : i32 to vector<4x1xi32>
    %705 = arith.cmpi sgt, %0, %704 : vector<4x1xi32>
    %706 = vector.broadcast %639 : i32 to vector<4x1xi32>
    %707 = arith.cmpi sgt, %0, %706 : vector<4x1xi32>
    %708 = vector.shape_cast %705 : vector<4x1xi1> to vector<4x1xi1>
    %709 = vector.broadcast %708 : vector<4x1xi1> to vector<4x32xi1>
    %710 = arith.select %709, %677, %619 : vector<4x32xi1>, vector<4x32xf32>
    %711 = vector.shape_cast %707 : vector<4x1xi1> to vector<4x1xi1>
    %712 = vector.broadcast %711 : vector<4x1xi1> to vector<4x32xi1>
    %713 = arith.select %712, %703, %622 : vector<4x32xi1>, vector<4x32xf32>
    %cst_170 = arith.constant 0.000000e+00 : f32
    %714 = vector.shape_cast %705 : vector<4x1xi1> to vector<4x1xi1>
    %715 = vector.broadcast %714 : vector<4x1xi1> to vector<4x32xi1>
    %716 = vector.broadcast %cst_170 : f32 to vector<4x32xf32>
    %717 = arith.select %715, %677, %716 : vector<4x32xi1>, vector<4x32xf32>
    %718 = arith.index_cast %c7_i32_153 : i32 to index
    %c0_171 = arith.constant 0 : index
    %c0_172 = arith.constant 0 : index
    %719 = vector.load %arg4[%718, %c0_171, %c0_172] : memref<8x4x64xf32, #tpu.memory_space<vmem>>, vector<1x4x32xf32>
    %720 = vector.shape_cast %719 : vector<1x4x32xf32> to vector<4x32xf32>
    %721 = vector.shape_cast %717 : vector<4x32xf32> to vector<1x4x32xf32>
    tpu.vector_store %arg4[%718, %c0_171, %c0_172], %721 {strides = array<i32>} : memref<8x4x64xf32, #tpu.memory_space<vmem>>, vector<1x4x32xf32>,
    %cst_173 = arith.constant 0.000000e+00 : f32
    %722 = vector.shape_cast %707 : vector<4x1xi1> to vector<4x1xi1>
    %723 = vector.broadcast %722 : vector<4x1xi1> to vector<4x32xi1>
    %724 = vector.broadcast %cst_173 : f32 to vector<4x32xf32>
    %725 = arith.select %723, %703, %724 : vector<4x32xi1>, vector<4x32xf32>
    %726 = arith.index_cast %639 : i32 to index
    %c0_174 = arith.constant 0 : index
    %c32_175 = arith.constant 32 : index
    %727 = vector.load %arg4[%726, %c0_174, %c32_175] : memref<8x4x64xf32, #tpu.memory_space<vmem>>, vector<1x4x32xf32>
    %728 = vector.shape_cast %727 : vector<1x4x32xf32> to vector<4x32xf32>
    %729 = vector.shape_cast %725 : vector<4x32xf32> to vector<1x4x32xf32>
    tpu.vector_store %arg4[%726, %c0_174, %c32_175], %729 {strides = array<i32>} : memref<8x4x64xf32, #tpu.memory_space<vmem>>, vector<1x4x32xf32>,
    %c8_i32 = arith.constant 8 : i32
    %730 = tpu.concatenate %710, %713 in 1 : vector<4x32xf32>, vector<4x32xf32> -> vector<4x64xf32>
    %c0_176 = arith.constant 0 : index
    %c0_177 = arith.constant 0 : index
    %731 = vector.load %arg5[%c0_176, %c0_177] : memref<4x64xf32, #tpu.memory_space<vmem>>, vector<4x64xf32>
    tpu.vector_store %arg5[%c0_176, %c0_177], %730 {strides = array<i32>} : memref<4x64xf32, #tpu.memory_space<vmem>>, vector<4x64xf32>,
    return
  }
}

</mosaic_0001>

<llo_original>
// kernel: encoder_forward.2
$region0: #{encoder_forward.2}
  #allocation0 [shape = 'u32[]', space=smem, size = 0x4, offset = 0x4, fixed_abs, tag = 'smem constant byte address 0x4 - core index']
  #allocation1 [shape = 'u32[144,128]{1,0:T(1,128)}', space=vmem, size = 0x12000, scoped, tag = 'internal scratch']
  %s0 = inlined_call_operand.vmem [shape: f32[8,4,192], index: 0, kind: input, shape index: {}]
  %s1 = inlined_call_operand.vmem [shape: s32[4,1], index: 1, kind: input, shape index: {}]
  %s2 = inlined_call_operand.vmem [shape: f32[64,192], index: 2, kind: input, shape index: {}]
  %s3 = inlined_call_operand.vmem [shape: f32[1,192], index: 3, kind: input, shape index: {}]
  %s4 = inlined_call_operand.vmem [shape: f32[8,4,64], index: 4, kind: output, shape index: {0}]
  %s5 = inlined_call_operand.vmem [shape: f32[4,64], index: 5, kind: output, shape index: {1}]
  %6 = xla_tuple %s4, %s5
  %s7 = sld [smem:[#allocation0]]
  $region34: #{encoder_forward.2} parent=0
    _
  %s9 = ssub.s32 1, %s7
  %s10 = scalar_select 0, %s9, %s7
  // Predicated region
  $region2: #{encoder_forward.2} parent=0 // pred_check
    _
  $region3: #{encoder_forward.2} parent=0 // pred_check_branch
    %12 = sbr.rel (0) target = $region5
  $region4: #{encoder_forward.2} parent=0 // pred_region
    _
  $region5: #{encoder_forward.2} parent=0 // pred_fallthru
    _
  // Predicated region
  $region6: #{encoder_forward.2} parent=0 // pred_check
    _
  $region7: #{encoder_forward.2} parent=0 // pred_check_branch
    %14 = sbr.rel (0) target = $region9
  $region8: #{encoder_forward.2} parent=0 // pred_region
    _
  $region9: #{encoder_forward.2} parent=0 // pred_fallthru
    _
  // Predicated region
  $region10: #{encoder_forward.2} parent=0 // pred_check
    _
  $region11: #{encoder_forward.2} parent=0 // pred_check_branch
    %16 = sbr.rel (0) target = $region13
  $region12: #{encoder_forward.2} parent=0 // pred_region
    _
  $region13: #{encoder_forward.2} parent=0 // pred_fallthru
    _
  // Predicated region
  $region14: #{encoder_forward.2} parent=0 // pred_check
    _
  $region15: #{encoder_forward.2} parent=0 // pred_check_branch
    %18 = sbr.rel (0) target = $region17
  $region16: #{encoder_forward.2} parent=0 // pred_region
    _
  $region17: #{encoder_forward.2} parent=0 // pred_fallthru
    _
  %v19 = vld [vmem:[%s1] sm:$0xf]
  %v20 = vld [vmem:[%s2] sm:$0xff]
  %v21 = vld [vmem:[%s2 + $0x8] sm:$0xff]
  %v22 = vld [vmem:[%s2 + $0x10] sm:$0xff]
  %v23 = vld [vmem:[%s2 + $0x18] sm:$0xff]
  %v24 = vld [vmem:[%s2 + $0x20] sm:$0xff]
  %v25 = vld [vmem:[%s2 + $0x28] sm:$0xff]
  %v26 = vld [vmem:[%s2 + $0x30] sm:$0xff]
  %v27 = vld [vmem:[%s2 + $0x38] sm:$0xff]
  %v28 = vld [vmem:[%s2 + $0x40] sm:$0xff]
  %v29 = vld [vmem:[%s2 + $0x48] sm:$0xff]
  %v30 = vld [vmem:[%s2 + $0x50] sm:$0xff]
  %v31 = vld [vmem:[%s2 + $0x58] sm:$0xff]
  %v32 = vld [vmem:[%s2 + $0x60] sm:$0xff]
  %v33 = vld [vmem:[%s2 + $0x68] sm:$0xff]
  %v34 = vld [vmem:[%s2 + $0x70] sm:$0xff]
  %v35 = vld [vmem:[%s2 + $0x78] sm:$0xff]
  %v36 = vld [vmem:[%s3] sm:$0x3]
  %v38 = vlaneseq
  %v39 = vshrl.u32 %v38, 7
  %v40 = vsub.s32 0, %v39
  %v41 = vrot.slane %v36, %v40
  %v42 = vlaneseq
  %v43 = vshrl.u32 %v42, 7
  %v44 = vsub.s32 1, %v43
  %v45 = vrot.slane %v36, %v44
  %vm48 = vcmask 523264
  %v50 = vsel %vm48, 0.0, 0
  %52 = vmatprep.subr.mxu0 0.0
  %53 = vmatpush1.msra.mxu0 0.0
  %54 = vmatprep.subr.mxu0 0.0
  %55 = vmatpush1.msra.mxu0 0.0
  %56 = vmatprep.subr.mxu0 0.0
  %57 = vmatpush1.msra.mxu0 0.0
  %58 = vmatprep.subr.mxu0 0.0
  %59 = vmatpush1.msra.mxu0 0.0
  %60 = vmatprep.subr.mxu0 0.0
  %61 = vmatpush1.msra.mxu0 0.0
  %62 = vmatprep.subr.mxu0 0.0
  %63 = vmatpush1.msra.mxu0 0.0
  %64 = vmatprep.subr.mxu0 0.0
  %65 = vmatpush1.msra.mxu0 0.0
  %66 = vmatprep.subr.mxu0 0.0
  %67 = vmatpush1.msra.mxu0 0.0
  %68 = vmatprep.subr.mxu0 %v35
  %69 = vmatpush1.msra.mxu0 %v34
  %70 = vmatprep.subr.mxu0 %v33
  %71 = vmatpush1.msra.mxu0 %v32
  %72 = vmatprep.subr.mxu0 %v31
  %73 = vmatpush1.msra.mxu0 %v30
  %74 = vmatprep.subr.mxu0 %v29
  %75 = vmatpush1.msra.mxu0 %v28
  %76 = vmatprep.subr.mxu0 %v27
  %77 = vmatpush1.msra.mxu0 %v26
  %78 = vmatprep.subr.mxu0 %v25
  %79 = vmatpush1.msra.mxu0 %v24
  %80 = vmatprep.subr.mxu0 %v23
  %81 = vmatpush1.msra.mxu0 %v22
  %82 = vmatprep.subr.mxu0 %v21
  %83 = vmatpush1.msra.mxu0 %v20
  %84 = vmatprep.subr.mxu0 0.0
  %85 = vmatpush2.msra.mxu0 0.0
  %86 = vmatprep.subr.mxu0 0.0
  %87 = vmatpush2.msra.mxu0 0.0
  %88 = vmatprep.subr.mxu0 0.0
  %89 = vmatpush2.msra.mxu0 0.0
  %90 = vmatprep.subr.mxu0 0.0
  %91 = vmatpush2.msra.mxu0 0.0
  %92 = vmatprep.subr.mxu0 0.0
  %93 = vmatpush2.msra.mxu0 0.0
  %94 = vmatprep.subr.mxu0 0.0
  %95 = vmatpush2.msra.mxu0 0.0
  %96 = vmatprep.subr.mxu0 0.0
  %97 = vmatpush2.msra.mxu0 0.0
  %98 = vmatprep.subr.mxu0 0.0
  %99 = vmatpush2.msra.mxu0 0.0
  %100 = vmatprep.subr.mxu0 0.0
  %101 = vmatpush2.msra.mxu0 0.0
  %102 = vmatprep.subr.mxu0 0.0
  %103 = vmatpush2.msra.mxu0 0.0
  %104 = vmatprep.subr.mxu0 0.0
  %105 = vmatpush2.msra.mxu0 0.0
  %106 = vmatprep.subr.mxu0 0.0
  %107 = vmatpush2.msra.mxu0 0.0
  %108 = vmatprep.subr.mxu0 0.0
  %109 = vmatpush2.msra.mxu0 0.0
  %110 = vmatprep.subr.mxu0 0.0
  %111 = vmatpush2.msra.mxu0 0.0
  %112 = vmatprep.subr.mxu0 0.0
  %113 = vmatpush2.msra.mxu0 0.0
  %114 = vmatprep.subr.mxu0 0.0
  %115 = vmatpush2.msra.mxu0 0.0
  %116 = vmatprep.mubr.f32.mxu0 0.0
  %117 = vmatmul.mubr.f32.gmra.mxu0 %v50
  %v118 = vpop.f32.mrf.mxu0
  %v119 = vadd.f32 %v41, %v118
  %v120 = vpop.f32.mrf.mxu0
  %v121 = vadd.f32 %v45, %v120
  %122 = vdwg.mxu0
  %v123 = vld [vmem:[%s0] sm:$0xff]
  %s124 = scalar_lea.vmem %s0, 56
  %v125 = vld [vmem:[%s124] sm:$0xff]
  %v126 = vadd.f32 %v123, %v119
  %v127 = vxor.u32 %v126, 2147483648
  %v128 = vmul.f32 %v127, 1.442695
  %v129 = vpow.pop %v128
  %v130 = vadd.f32 %v129, 1.0
  %v131 = vrcp.pop %v130
  %v132 = vmul.f32 1.0, %v131
  %134 = vrot.lane.b32.xlu0 %v119, 64
  %v135 = vpop.permute.xlu0 %134
  %v137 = vmul.f32 %v132, %v135
  %139 = vrot.lane.b32.xlu0 %v137, 64
  %v140 = vpop.permute.xlu0 %139
  %v142 = vadd.f32 %v123, %v140
  %v143 = vtanh.pop %v142
  %v144 = vsub.f32 1.0, %v132
  %146 = vrot.lane.b32.xlu0 %v143, 96
  %v147 = vpop.permute.xlu0 %146
  %v149 = vmul.f32 %v144, %v147
  %v150 = vmul.f32 %v132, 0.0
  %v151 = vadd.f32 %v149, %v150
  %v152 = vadd.f32 %v125, %v119
  %v153 = vxor.u32 %v152, 2147483648
  %v154 = vmul.f32 %v153, 1.442695
  %v155 = vpow.pop %v154
  %v156 = vadd.f32 %v155, 1.0
  %v157 = vrcp.pop %v156
  %v158 = vmul.f32 1.0, %v157
  %v160 = vrot.slane %v125, 4
  %v162 = vadd.f32 %v160, %v121
  %v163 = vxor.u32 %v162, 2147483648
  %v164 = vmul.f32 %v163, 1.442695
  %v165 = vpow.pop %v164
  %v166 = vadd.f32 %v165, 1.0
  %v167 = vrcp.pop %v166
  %v168 = vmul.f32 1.0, %v167
  %170 = vrot.lane.b32.xlu0 %v121, 64
  %v171 = vpop.permute.xlu0 %170
  %v173 = vmul.f32 %v158, %v171
  %174 = vrot.lane.b32.xlu0 %v125, 96
  %v175 = vpop.permute.xlu0 %174
  %v176 = vrot.slane %v175, 4
  %179 = vrot.lane.b32.xlu0 %v173, 32
  %v180 = vpop.permute.xlu0 %179
  %v182 = vadd.f32 %v176, %v180
  %v183 = vtanh.pop %v182
  %v184 = vsub.f32 1.0, %v168
  %v185 = vmul.f32 %v184, %v183
  %v186 = vmul.f32 %v168, 0.0
  %v187 = vadd.f32 %v185, %v186
  %vm188 = vcmp.gt.s32.totalorder %v19, 0
  %vm189 = vcmp.gt.s32.totalorder %v19, 7
  %v190 = vsel %vm188, 1, 0
  %191 = vset.pattern.permute.xlu0 0
  %192 = vperm.xlu0 %191, %v190
  %v193 = vpop.permute.xlu0 %192
  %vm194 = vcmp.eq.s32.totalorder %v193, 1
  %196 = vrot.lane.b32.xlu0 %v151, 96
  %v197 = vpop.permute.xlu0 %196
  %v199 = vsel %vm194, %v197, 0.0
  %v200 = vsel %vm189, 1, 0
  %201 = vset.pattern.permute.xlu0 0
  %202 = vperm.xlu0 %201, %v200
  %v203 = vpop.permute.xlu0 %202
  %vm204 = vcmp.eq.s32.totalorder %v203, 1
  %v205 = vsel %vm204, %v187, 0.0
  %vm206 = vcmask 257024
  %207 = vst.msk [vmem:[%s4] sm:$0xf] %vm206, %v199
  %209 = vrot.lane.b32.xlu0 %v205, 32
  %v210 = vpop.permute.xlu0 %209
  %s212 = scalar_lea.vmem %s4, 28
  %vm213 = vcmask 519424
  %214 = vst.msk [vmem:[%s212] sm:$0xf] %vm213, %v210
  %vm215 = vcmask 261120
  %v216 = vsel %vm215, %v199, %v210
  %v217 = vld [vmem:[%s2] sm:$0xff]
  %v218 = vld [vmem:[%s2 + $0x8] sm:$0xff]
  %v219 = vld [vmem:[%s2 + $0x10] sm:$0xff]
  %v220 = vld [vmem:[%s2 + $0x18] sm:$0xff]
  %v221 = vld [vmem:[%s2 + $0x20] sm:$0xff]
  %v222 = vld [vmem:[%s2 + $0x28] sm:$0xff]
  %v223 = vld [vmem:[%s2 + $0x30] sm:$0xff]
  %v224 = vld [vmem:[%s2 + $0x38] sm:$0xff]
  %v225 = vld [vmem:[%s2 + $0x40] sm:$0xff]
  %v226 = vld [vmem:[%s2 + $0x48] sm:$0xff]
  %v227 = vld [vmem:[%s2 + $0x50] sm:$0xff]
  %v228 = vld [vmem:[%s2 + $0x58] sm:$0xff]
  %v229 = vld [vmem:[%s2 + $0x60] sm:$0xff]
  %v230 = vld [vmem:[%s2 + $0x68] sm:$0xff]
  %v231 = vld [vmem:[%s2 + $0x70] sm:$0xff]
  %v232 = vld [vmem:[%s2 + $0x78] sm:$0xff]
  %v233 = vld [vmem:[%s3] sm:$0x3]
  %v235 = vlaneseq
  %v236 = vshrl.u32 %v235, 7
  %v237 = vsub.s32 0, %v236
  %v238 = vrot.slane %v233, %v237
  %v239 = vlaneseq
  %v240 = vshrl.u32 %v239, 7
  %v241 = vsub.s32 1, %v240
  %v242 = vrot.slane %v233, %v241
  %v246 = vsel %vm48, %v216, 0
  %248 = vmatprep.subr.mxu0 0.0
  %249 = vmatpush1.msra.mxu0 0.0
  %250 = vmatprep.subr.mxu0 0.0
  %251 = vmatpush1.msra.mxu0 0.0
  %252 = vmatprep.subr.mxu0 0.0
  %253 = vmatpush1.msra.mxu0 0.0
  %254 = vmatprep.subr.mxu0 0.0
  %255 = vmatpush1.msra.mxu0 0.0
  %256 = vmatprep.subr.mxu0 0.0
  %257 = vmatpush1.msra.mxu0 0.0
  %258 = vmatprep.subr.mxu0 0.0
  %259 = vmatpush1.msra.mxu0 0.0
  %260 = vmatprep.subr.mxu0 0.0
  %261 = vmatpush1.msra.mxu0 0.0
  %262 = vmatprep.subr.mxu0 0.0
  %263 = vmatpush1.msra.mxu0 0.0
  %264 = vmatprep.subr.mxu0 %v232
  %265 = vmatpush1.msra.mxu0 %v231
  %266 = vmatprep.subr.mxu0 %v230
  %267 = vmatpush1.msra.mxu0 %v229
  %268 = vmatprep.subr.mxu0 %v228
  %269 = vmatpush1.msra.mxu0 %v227
  %270 = vmatprep.subr.mxu0 %v226
  %271 = vmatpush1.msra.mxu0 %v225
  %272 = vmatprep.subr.mxu0 %v224
  %273 = vmatpush1.msra.mxu0 %v223
  %274 = vmatprep.subr.mxu0 %v222
  %275 = vmatpush1.msra.mxu0 %v221
  %276 = vmatprep.subr.mxu0 %v220
  %277 = vmatpush1.msra.mxu0 %v219
  %278 = vmatprep.subr.mxu0 %v218
  %279 = vmatpush1.msra.mxu0 %v217
  %280 = vmatprep.subr.mxu0 0.0
  %281 = vmatpush2.msra.mxu0 0.0
  %282 = vmatprep.subr.mxu0 0.0
  %283 = vmatpush2.msra.mxu0 0.0
  %284 = vmatprep.subr.mxu0 0.0
  %285 = vmatpush2.msra.mxu0 0.0
  %286 = vmatprep.subr.mxu0 0.0
  %287 = vmatpush2.msra.mxu0 0.0
  %288 = vmatprep.subr.mxu0 0.0
  %289 = vmatpush2.msra.mxu0 0.0
  %290 = vmatprep.subr.mxu0 0.0
  %291 = vmatpush2.msra.mxu0 0.0
  %292 = vmatprep.subr.mxu0 0.0
  %293 = vmatpush2.msra.mxu0 0.0
  %294 = vmatprep.subr.mxu0 0.0
  %295 = vmatpush2.msra.mxu0 0.0
  %296 = vmatprep.subr.mxu0 0.0
  %297 = vmatpush2.msra.mxu0 0.0
  %298 = vmatprep.subr.mxu0 0.0
  %299 = vmatpush2.msra.mxu0 0.0
  %300 = vmatprep.subr.mxu0 0.0
  %301 = vmatpush2.msra.mxu0 0.0
  %302 = vmatprep.subr.mxu0 0.0
  %303 = vmatpush2.msra.mxu0 0.0
  %304 = vmatprep.subr.mxu0 0.0
  %305 = vmatpush2.msra.mxu0 0.0
  %306 = vmatprep.subr.mxu0 0.0
  %307 = vmatpush2.msra.mxu0 0.0
  %308 = vmatprep.subr.mxu0 0.0
  %309 = vmatpush2.msra.mxu0 0.0
  %310 = vmatprep.subr.mxu0 0.0
  %311 = vmatpush2.msra.mxu0 0.0
  %312 = vmatprep.mubr.f32.mxu0 0.0
  %313 = vmatmul.mubr.f32.gmra.mxu0 %v246
  %v314 = vpop.f32.mrf.mxu0
  %v315 = vadd.f32 %v238, %v314
  %v316 = vpop.f32.mrf.mxu0
  %v317 = vadd.f32 %v242, %v316
  %318 = vdwg.mxu0
  %s319 = scalar_lea.vmem %s0, 8
  %v320 = vld [vmem:[%s319] sm:$0xff]
  %s321 = scalar_lea.vmem %s0, 48
  %v322 = vld [vmem:[%s321] sm:$0xff]
  %v323 = vadd.f32 %v320, %v315
  %v324 = vxor.u32 %v323, 2147483648
  %v325 = vmul.f32 %v324, 1.442695
  %v326 = vpow.pop %v325
  %v327 = vadd.f32 %v326, 1.0
  %v328 = vrcp.pop %v327
  %v329 = vmul.f32 1.0, %v328
  %331 = vrot.lane.b32.xlu0 %v315, 64
  %v332 = vpop.permute.xlu0 %331
  %v334 = vmul.f32 %v329, %v332
  %336 = vrot.lane.b32.xlu0 %v334, 64
  %v337 = vpop.permute.xlu0 %336
  %v339 = vadd.f32 %v320, %v337
  %v340 = vtanh.pop %v339
  %v341 = vsub.f32 1.0, %v329
  %343 = vrot.lane.b32.xlu0 %v340, 96
  %v344 = vpop.permute.xlu0 %343
  %v346 = vmul.f32 %v341, %v344
  %348 = vrot.lane.b32.xlu0 %v199, 32
  %v349 = vpop.permute.xlu0 %348
  %v351 = vmul.f32 %v329, %v349
  %v352 = vadd.f32 %v346, %v351
  %v353 = vadd.f32 %v322, %v315
  %v354 = vxor.u32 %v353, 2147483648
  %v355 = vmul.f32 %v354, 1.442695
  %v356 = vpow.pop %v355
  %v357 = vadd.f32 %v356, 1.0
  %v358 = vrcp.pop %v357
  %v359 = vmul.f32 1.0, %v358
  %v361 = vrot.slane %v322, 4
  %v363 = vadd.f32 %v361, %v317
  %v364 = vxor.u32 %v363, 2147483648
  %v365 = vmul.f32 %v364, 1.442695
  %v366 = vpow.pop %v365
  %v367 = vadd.f32 %v366, 1.0
  %v368 = vrcp.pop %v367
  %v369 = vmul.f32 1.0, %v368
  %371 = vrot.lane.b32.xlu0 %v317, 64
  %v372 = vpop.permute.xlu0 %371
  %v374 = vmul.f32 %v359, %v372
  %375 = vrot.lane.b32.xlu0 %v322, 96
  %v376 = vpop.permute.xlu0 %375
  %v377 = vrot.slane %v376, 4
  %380 = vrot.lane.b32.xlu0 %v374, 32
  %v381 = vpop.permute.xlu0 %380
  %v383 = vadd.f32 %v377, %v381
  %v384 = vtanh.pop %v383
  %v385 = vsub.f32 1.0, %v369
  %v386 = vmul.f32 %v385, %v384
  %v387 = vmul.f32 %v369, %v205
  %v388 = vadd.f32 %v386, %v387
  %vm389 = vcmp.gt.s32.totalorder %v19, 1
  %vm390 = vcmp.gt.s32.totalorder %v19, 6
  %v391 = vsel %vm389, 1, 0
  %392 = vset.pattern.permute.xlu0 0
  %393 = vperm.xlu0 %392, %v391
  %v394 = vpop.permute.xlu0 %393
  %vm395 = vcmp.eq.s32.totalorder %v394, 1
  %397 = vrot.lane.b32.xlu0 %v352, 96
  %v398 = vpop.permute.xlu0 %397
  %v400 = vsel %vm395, %v398, %v199
  %v401 = vsel %vm390, 1, 0
  %402 = vset.pattern.permute.xlu0 0
  %403 = vperm.xlu0 %402, %v401
  %v404 = vpop.permute.xlu0 %403
  %vm405 = vcmp.eq.s32.totalorder %v404, 1
  %v406 = vsel %vm405, %v388, %v205
  %v407 = vsel %vm395, %v398, 0.0
  %s408 = scalar_lea.vmem %s4, 4
  %409 = vst.msk [vmem:[%s408] sm:$0xf] %vm206, %v407
  %v410 = vsel %vm405, %v388, 0.0
  %412 = vrot.lane.b32.xlu0 %v410, 32
  %v413 = vpop.permute.xlu0 %412
  %s415 = scalar_lea.vmem %s4, 24
  %416 = vst.msk [vmem:[%s415] sm:$0xf] %vm213, %v413
  %418 = vrot.lane.b32.xlu0 %v406, 32
  %v419 = vpop.permute.xlu0 %418
  %v421 = vsel %vm215, %v400, %v419
  %v422 = vld [vmem:[%s2] sm:$0xff]
  %v423 = vld [vmem:[%s2 + $0x8] sm:$0xff]
  %v424 = vld [vmem:[%s2 + $0x10] sm:$0xff]
  %v425 = vld [vmem:[%s2 + $0x18] sm:$0xff]
  %v426 = vld [vmem:[%s2 + $0x20] sm:$0xff]
  %v427 = vld [vmem:[%s2 + $0x28] sm:$0xff]
  %v428 = vld [vmem:[%s2 + $0x30] sm:$0xff]
  %v429 = vld [vmem:[%s2 + $0x38] sm:$0xff]
  %v430 = vld [vmem:[%s2 + $0x40] sm:$0xff]
  %v431 = vld [vmem:[%s2 + $0x48] sm:$0xff]
  %v432 = vld [vmem:[%s2 + $0x50] sm:$0xff]
  %v433 = vld [vmem:[%s2 + $0x58] sm:$0xff]
  %v434 = vld [vmem:[%s2 + $0x60] sm:$0xff]
  %v435 = vld [vmem:[%s2 + $0x68] sm:$0xff]
  %v436 = vld [vmem:[%s2 + $0x70] sm:$0xff]
  %v437 = vld [vmem:[%s2 + $0x78] sm:$0xff]
  %v438 = vld [vmem:[%s3] sm:$0x3]
  %v440 = vlaneseq
  %v441 = vshrl.u32 %v440, 7
  %v442 = vsub.s32 0, %v441
  %v443 = vrot.slane %v438, %v442
  %v444 = vlaneseq
  %v445 = vshrl.u32 %v444, 7
  %v446 = vsub.s32 1, %v445
  %v447 = vrot.slane %v438, %v446
  %v451 = vsel %vm48, %v421, 0
  %453 = vmatprep.subr.mxu0 0.0
  %454 = vmatpush1.msra.mxu0 0.0
  %455 = vmatprep.subr.mxu0 0.0
  %456 = vmatpush1.msra.mxu0 0.0
  %457 = vmatprep.subr.mxu0 0.0
  %458 = vmatpush1.msra.mxu0 0.0
  %459 = vmatprep.subr.mxu0 0.0
  %460 = vmatpush1.msra.mxu0 0.0
  %461 = vmatprep.subr.mxu0 0.0
  %462 = vmatpush1.msra.mxu0 0.0
  %463 = vmatprep.subr.mxu0 0.0
  %464 = vmatpush1.msra.mxu0 0.0
  %465 = vmatprep.subr.mxu0 0.0
  %466 = vmatpush1.msra.mxu0 0.0
  %467 = vmatprep.subr.mxu0 0.0
  %468 = vmatpush1.msra.mxu0 0.0
  %469 = vmatprep.subr.mxu0 %v437
  %470 = vmatpush1.msra.mxu0 %v436
  %471 = vmatprep.subr.mxu0 %v435
  %472 = vmatpush1.msra.mxu0 %v434
  %473 = vmatprep.subr.mxu0 %v433
  %474 = vmatpush1.msra.mxu0 %v432
  %475 = vmatprep.subr.mxu0 %v431
  %476 = vmatpush1.msra.mxu0 %v430
  %477 = vmatprep.subr.mxu0 %v429
  %478 = vmatpush1.msra.mxu0 %v428
  %479 = vmatprep.subr.mxu0 %v427
  %480 = vmatpush1.msra.mxu0 %v426
  %481 = vmatprep.subr.mxu0 %v425
  %482 = vmatpush1.msra.mxu0 %v424
  %483 = vmatprep.subr.mxu0 %v423
  %484 = vmatpush1.msra.mxu0 %v422
  %485 = vmatprep.subr.mxu0 0.0
  %486 = vmatpush2.msra.mxu0 0.0
  %487 = vmatprep.subr.mxu0 0.0
  %488 = vmatpush2.msra.mxu0 0.0
  %489 = vmatprep.subr.mxu0 0.0
  %490 = vmatpush2.msra.mxu0 0.0
  %491 = vmatprep.subr.mxu0 0.0
  %492 = vmatpush2.msra.mxu0 0.0
  %493 = vmatprep.subr.mxu0 0.0
  %494 = vmatpush2.msra.mxu0 0.0
  %495 = vmatprep.subr.mxu0 0.0
  %496 = vmatpush2.msra.mxu0 0.0
  %497 = vmatprep.subr.mxu0 0.0
  %498 = vmatpush2.msra.mxu0 0.0
  %499 = vmatprep.subr.mxu0 0.0
  %500 = vmatpush2.msra.mxu0 0.0
  %501 = vmatprep.subr.mxu0 0.0
  %502 = vmatpush2.msra.mxu0 0.0
  %503 = vmatprep.subr.mxu0 0.0
  %504 = vmatpush2.msra.mxu0 0.0
  %505 = vmatprep.subr.mxu0 0.0
  %506 = vmatpush2.msra.mxu0 0.0
  %507 = vmatprep.subr.mxu0 0.0
  %508 = vmatpush2.msra.mxu0 0.0
  %509 = vmatprep.subr.mxu0 0.0
  %510 = vmatpush2.msra.mxu0 0.0
  %511 = vmatprep.subr.mxu0 0.0
  %512 = vmatpush2.msra.mxu0 0.0
  %513 = vmatprep.subr.mxu0 0.0
  %514 = vmatpush2.msra.mxu0 0.0
  %515 = vmatprep.subr.mxu0 0.0
  %516 = vmatpush2.msra.mxu0 0.0
  %517 = vmatprep.mubr.f32.mxu0 0.0
  %518 = vmatmul.mubr.f32.gmra.mxu0 %v451
  %v519 = vpop.f32.mrf.mxu0
  %v520 = vadd.f32 %v443, %v519
  %v521 = vpop.f32.mrf.mxu0
  %v522 = vadd.f32 %v447, %v521
  %523 = vdwg.mxu0
  %s524 = scalar_lea.vmem %s0, 16
  %v525 = vld [vmem:[%s524] sm:$0xff]
  %s526 = scalar_lea.vmem %s0, 40
  %v527 = vld [vmem:[%s526] sm:$0xff]
  %v528 = vadd.f32 %v525, %v520
  %v529 = vxor.u32 %v528, 2147483648
  %v530 = vmul.f32 %v529, 1.442695
  %v531 = vpow.pop %v530
  %v532 = vadd.f32 %v531, 1.0
  %v533 = vrcp.pop %v532
  %v534 = vmul.f32 1.0, %v533
  %536 = vrot.lane.b32.xlu0 %v520, 64
  %v537 = vpop.permute.xlu0 %536
  %v539 = vmul.f32 %v534, %v537
  %541 = vrot.lane.b32.xlu0 %v539, 64
  %v542 = vpop.permute.xlu0 %541
  %v544 = vadd.f32 %v525, %v542
  %v545 = vtanh.pop %v544
  %v546 = vsub.f32 1.0, %v534
  %548 = vrot.lane.b32.xlu0 %v545, 96
  %v549 = vpop.permute.xlu0 %548
  %v551 = vmul.f32 %v546, %v549
  %553 = vrot.lane.b32.xlu0 %v400, 32
  %v554 = vpop.permute.xlu0 %553
  %v556 = vmul.f32 %v534, %v554
  %v557 = vadd.f32 %v551, %v556
  %v558 = vadd.f32 %v527, %v520
  %v559 = vxor.u32 %v558, 2147483648
  %v560 = vmul.f32 %v559, 1.442695
  %v561 = vpow.pop %v560
  %v562 = vadd.f32 %v561, 1.0
  %v563 = vrcp.pop %v562
  %v564 = vmul.f32 1.0, %v563
  %v566 = vrot.slane %v527, 4
  %v568 = vadd.f32 %v566, %v522
  %v569 = vxor.u32 %v568, 2147483648
  %v570 = vmul.f32 %v569, 1.442695
  %v571 = vpow.pop %v570
  %v572 = vadd.f32 %v571, 1.0
  %v573 = vrcp.pop %v572
  %v574 = vmul.f32 1.0, %v573
  %576 = vrot.lane.b32.xlu0 %v522, 64
  %v577 = vpop.permute.xlu0 %576
  %v579 = vmul.f32 %v564, %v577
  %580 = vrot.lane.b32.xlu0 %v527, 96
  %v581 = vpop.permute.xlu0 %580
  %v582 = vrot.slane %v581, 4
  %585 = vrot.lane.b32.xlu0 %v579, 32
  %v586 = vpop.permute.xlu0 %585
  %v588 = vadd.f32 %v582, %v586
  %v589 = vtanh.pop %v588
  %v590 = vsub.f32 1.0, %v574
  %v591 = vmul.f32 %v590, %v589
  %v592 = vmul.f32 %v574, %v406
  %v593 = vadd.f32 %v591, %v592
  %vm594 = vcmp.gt.s32.totalorder %v19, 2
  %vm595 = vcmp.gt.s32.totalorder %v19, 5
  %v596 = vsel %vm594, 1, 0
  %597 = vset.pattern.permute.xlu0 0
  %598 = vperm.xlu0 %597, %v596
  %v599 = vpop.permute.xlu0 %598
  %vm600 = vcmp.eq.s32.totalorder %v599, 1
  %602 = vrot.lane.b32.xlu0 %v557, 96
  %v603 = vpop.permute.xlu0 %602
  %v605 = vsel %vm600, %v603, %v400
  %v606 = vsel %vm595, 1, 0
  %607 = vset.pattern.permute.xlu0 0
  %608 = vperm.xlu0 %607, %v606
  %v609 = vpop.permute.xlu0 %608
  %vm610 = vcmp.eq.s32.totalorder %v609, 1
  %v611 = vsel %vm610, %v593, %v406
  %v612 = vsel %vm600, %v603, 0.0
  %s613 = scalar_lea.vmem %s4, 8
  %614 = vst.msk [vmem:[%s613] sm:$0xf] %vm206, %v612
  %v615 = vsel %vm610, %v593, 0.0
  %617 = vrot.lane.b32.xlu0 %v615, 32
  %v618 = vpop.permute.xlu0 %617
  %s620 = scalar_lea.vmem %s4, 20
  %621 = vst.msk [vmem:[%s620] sm:$0xf] %vm213, %v618
  %623 = vrot.lane.b32.xlu0 %v611, 32
  %v624 = vpop.permute.xlu0 %623
  %v626 = vsel %vm215, %v605, %v624
  %v627 = vld [vmem:[%s2] sm:$0xff]
  %v628 = vld [vmem:[%s2 + $0x8] sm:$0xff]
  %v629 = vld [vmem:[%s2 + $0x10] sm:$0xff]
  %v630 = vld [vmem:[%s2 + $0x18] sm:$0xff]
  %v631 = vld [vmem:[%s2 + $0x20] sm:$0xff]
  %v632 = vld [vmem:[%s2 + $0x28] sm:$0xff]
  %v633 = vld [vmem:[%s2 + $0x30] sm:$0xff]
  %v634 = vld [vmem:[%s2 + $0x38] sm:$0xff]
  %v635 = vld [vmem:[%s2 + $0x40] sm:$0xff]
  %v636 = vld [vmem:[%s2 + $0x48] sm:$0xff]
  %v637 = vld [vmem:[%s2 + $0x50] sm:$0xff]
  %v638 = vld [vmem:[%s2 + $0x58] sm:$0xff]
  %v639 = vld [vmem:[%s2 + $0x60] sm:$0xff]
  %v640 = vld [vmem:[%s2 + $0x68] sm:$0xff]
  %v641 = vld [vmem:[%s2 + $0x70] sm:$0xff]
  %v642 = vld [vmem:[%s2 + $0x78] sm:$0xff]
  %v643 = vld [vmem:[%s3] sm:$0x3]
  %v645 = vlaneseq
  %v646 = vshrl.u32 %v645, 7
  %v647 = vsub.s32 0, %v646
  %v648 = vrot.slane %v643, %v647
  %v649 = vlaneseq
  %v650 = vshrl.u32 %v649, 7
  %v651 = vsub.s32 1, %v650
  %v652 = vrot.slane %v643, %v651
  %v656 = vsel %vm48, %v626, 0
  %658 = vmatprep.subr.mxu0 0.0
  %659 = vmatpush1.msra.mxu0 0.0
  %660 = vmatprep.subr.mxu0 0.0
  %661 = vmatpush1.msra.mxu0 0.0
  %662 = vmatprep.subr.mxu0 0.0
  %663 = vmatpush1.msra.mxu0 0.0
  %664 = vmatprep.subr.mxu0 0.0
  %665 = vmatpush1.msra.mxu0 0.0
  %666 = vmatprep.subr.mxu0 0.0
  %667 = vmatpush1.msra.mxu0 0.0
  %668 = vmatprep.subr.mxu0 0.0
  %669 = vmatpush1.msra.mxu0 0.0
  %670 = vmatprep.subr.mxu0 0.0
  %671 = vmatpush1.msra.mxu0 0.0
  %672 = vmatprep.subr.mxu0 0.0
  %673 = vmatpush1.msra.mxu0 0.0
  %674 = vmatprep.subr.mxu0 %v642
  %675 = vmatpush1.msra.mxu0 %v641
  %676 = vmatprep.subr.mxu0 %v640
  %677 = vmatpush1.msra.mxu0 %v639
  %678 = vmatprep.subr.mxu0 %v638
  %679 = vmatpush1.msra.mxu0 %v637
  %680 = vmatprep.subr.mxu0 %v636
  %681 = vmatpush1.msra.mxu0 %v635
  %682 = vmatprep.subr.mxu0 %v634
  %683 = vmatpush1.msra.mxu0 %v633
  %684 = vmatprep.subr.mxu0 %v632
  %685 = vmatpush1.msra.mxu0 %v631
  %686 = vmatprep.subr.mxu0 %v630
  %687 = vmatpush1.msra.mxu0 %v629
  %688 = vmatprep.subr.mxu0 %v628
  %689 = vmatpush1.msra.mxu0 %v627
  %690 = vmatprep.subr.mxu0 0.0
  %691 = vmatpush2.msra.mxu0 0.0
  %692 = vmatprep.subr.mxu0 0.0
  %693 = vmatpush2.msra.mxu0 0.0
  %694 = vmatprep.subr.mxu0 0.0
  %695 = vmatpush2.msra.mxu0 0.0
  %696 = vmatprep.subr.mxu0 0.0
  %697 = vmatpush2.msra.mxu0 0.0
  %698 = vmatprep.subr.mxu0 0.0
  %699 = vmatpush2.msra.mxu0 0.0
  %700 = vmatprep.subr.mxu0 0.0
  %701 = vmatpush2.msra.mxu0 0.0
  %702 = vmatprep.subr.mxu0 0.0
  %703 = vmatpush2.msra.mxu0 0.0
  %704 = vmatprep.subr.mxu0 0.0
  %705 = vmatpush2.msra.mxu0 0.0
  %706 = vmatprep.subr.mxu0 0.0
  %707 = vmatpush2.msra.mxu0 0.0
  %708 = vmatprep.subr.mxu0 0.0
  %709 = vmatpush2.msra.mxu0 0.0
  %710 = vmatprep.subr.mxu0 0.0
  %711 = vmatpush2.msra.mxu0 0.0
  %712 = vmatprep.subr.mxu0 0.0
  %713 = vmatpush2.msra.mxu0 0.0
  %714 = vmatprep.subr.mxu0 0.0
  %715 = vmatpush2.msra.mxu0 0.0
  %716 = vmatprep.subr.mxu0 0.0
  %717 = vmatpush2.msra.mxu0 0.0
  %718 = vmatprep.subr.mxu0 0.0
  %719 = vmatpush2.msra.mxu0 0.0
  %720 = vmatprep.subr.mxu0 0.0
  %721 = vmatpush2.msra.mxu0 0.0
  %722 = vmatprep.mubr.f32.mxu0 0.0
  %723 = vmatmul.mubr.f32.gmra.mxu0 %v656
  %v724 = vpop.f32.mrf.mxu0
  %v725 = vadd.f32 %v648, %v724
  %v726 = vpop.f32.mrf.mxu0
  %v727 = vadd.f32 %v652, %v726
  %728 = vdwg.mxu0
  %s729 = scalar_lea.vmem %s0, 24
  %v730 = vld [vmem:[%s729] sm:$0xff]
  %s731 = scalar_lea.vmem %s0, 32
  %v732 = vld [vmem:[%s731] sm:$0xff]
  %v733 = vadd.f32 %v730, %v725
  %v734 = vxor.u32 %v733, 2147483648
  %v735 = vmul.f32 %v734, 1.442695
  %v736 = vpow.pop %v735
  %v737 = vadd.f32 %v736, 1.0
  %v738 = vrcp.pop %v737
  %v739 = vmul.f32 1.0, %v738
  %741 = vrot.lane.b32.xlu0 %v725, 64
  %v742 = vpop.permute.xlu0 %741
  %v744 = vmul.f32 %v739, %v742
  %746 = vrot.lane.b32.xlu0 %v744, 64
  %v747 = vpop.permute.xlu0 %746
  %v749 = vadd.f32 %v730, %v747
  %v750 = vtanh.pop %v749
  %v751 = vsub.f32 1.0, %v739
  %753 = vrot.lane.b32.xlu0 %v750, 96
  %v754 = vpop.permute.xlu0 %753
  %v756 = vmul.f32 %v751, %v754
  %758 = vrot.lane.b32.xlu0 %v605, 32
  %v759 = vpop.permute.xlu0 %758
  %v761 = vmul.f32 %v739, %v759
  %v762 = vadd.f32 %v756, %v761
  %v763 = vadd.f32 %v732, %v725
  %v764 = vxor.u32 %v763, 2147483648
  %v765 = vmul.f32 %v764, 1.442695
  %v766 = vpow.pop %v765
  %v767 = vadd.f32 %v766, 1.0
  %v768 = vrcp.pop %v767
  %v769 = vmul.f32 1.0, %v768
  %v771 = vrot.slane %v732, 4
  %v773 = vadd.f32 %v771, %v727
  %v774 = vxor.u32 %v773, 2147483648
  %v775 = vmul.f32 %v774, 1.442695
  %v776 = vpow.pop %v775
  %v777 = vadd.f32 %v776, 1.0
  %v778 = vrcp.pop %v777
  %v779 = vmul.f32 1.0, %v778
  %781 = vrot.lane.b32.xlu0 %v727, 64
  %v782 = vpop.permute.xlu0 %781
  %v784 = vmul.f32 %v769, %v782
  %785 = vrot.lane.b32.xlu0 %v732, 96
  %v786 = vpop.permute.xlu0 %785
  %v787 = vrot.slane %v786, 4
  %790 = vrot.lane.b32.xlu0 %v784, 32
  %v791 = vpop.permute.xlu0 %790
  %v793 = vadd.f32 %v787, %v791
  %v794 = vtanh.pop %v793
  %v795 = vsub.f32 1.0, %v779
  %v796 = vmul.f32 %v795, %v794
  %v797 = vmul.f32 %v779, %v611
  %v798 = vadd.f32 %v796, %v797
  %vm799 = vcmp.gt.s32.totalorder %v19, 3
  %vm800 = vcmp.gt.s32.totalorder %v19, 4
  %v801 = vsel %vm799, 1, 0
  %802 = vset.pattern.permute.xlu0 0
  %803 = vperm.xlu0 %802, %v801
  %v804 = vpop.permute.xlu0 %803
  %vm805 = vcmp.eq.s32.totalorder %v804, 1
  %807 = vrot.lane.b32.xlu0 %v762, 96
  %v808 = vpop.permute.xlu0 %807
  %v810 = vsel %vm805, %v808, %v605
  %v811 = vsel %vm800, 1, 0
  %812 = vset.pattern.permute.xlu0 0
  %813 = vperm.xlu0 %812, %v811
  %v814 = vpop.permute.xlu0 %813
  %vm815 = vcmp.eq.s32.totalorder %v814, 1
  %v816 = vsel %vm815, %v798, %v611
  %v817 = vsel %vm805, %v808, 0.0
  %s818 = scalar_lea.vmem %s4, 12
  %819 = vst.msk [vmem:[%s818] sm:$0xf] %vm206, %v817
  %v820 = vsel %vm815, %v798, 0.0
  %822 = vrot.lane.b32.xlu0 %v820, 32
  %v823 = vpop.permute.xlu0 %822
  %s825 = scalar_lea.vmem %s4, 16
  %826 = vst.msk [vmem:[%s825] sm:$0xf] %vm213, %v823
  %828 = vrot.lane.b32.xlu0 %v816, 32
  %v829 = vpop.permute.xlu0 %828
  %v831 = vsel %vm215, %v810, %v829
  %v832 = vld [vmem:[%s2] sm:$0xff]
  %v833 = vld [vmem:[%s2 + $0x8] sm:$0xff]
  %v834 = vld [vmem:[%s2 + $0x10] sm:$0xff]
  %v835 = vld [vmem:[%s2 + $0x18] sm:$0xff]
  %v836 = vld [vmem:[%s2 + $0x20] sm:$0xff]
  %v837 = vld [vmem:[%s2 + $0x28] sm:$0xff]
  %v838 = vld [vmem:[%s2 + $0x30] sm:$0xff]
  %v839 = vld [vmem:[%s2 + $0x38] sm:$0xff]
  %v840 = vld [vmem:[%s2 + $0x40] sm:$0xff]
  %v841 = vld [vmem:[%s2 + $0x48] sm:$0xff]
  %v842 = vld [vmem:[%s2 + $0x50] sm:$0xff]
  %v843 = vld [vmem:[%s2 + $0x58] sm:$0xff]
  %v844 = vld [vmem:[%s2 + $0x60] sm:$0xff]
  %v845 = vld [vmem:[%s2 + $0x68] sm:$0xff]
  %v846 = vld [vmem:[%s2 + $0x70] sm:$0xff]
  %v847 = vld [vmem:[%s2 + $0x78] sm:$0xff]
  %v848 = vld [vmem:[%s3] sm:$0x3]
  %v850 = vlaneseq
  %v851 = vshrl.u32 %v850, 7
  %v852 = vsub.s32 0, %v851
  %v853 = vrot.slane %v848, %v852
  %v854 = vlaneseq
  %v855 = vshrl.u32 %v854, 7
  %v856 = vsub.s32 1, %v855
  %v857 = vrot.slane %v848, %v856
  %v861 = vsel %vm48, %v831, 0
  %863 = vmatprep.subr.mxu0 0.0
  %864 = vmatpush1.msra.mxu0 0.0
  %865 = vmatprep.subr.mxu0 0.0
  %866 = vmatpush1.msra.mxu0 0.0
  %867 = vmatprep.subr.mxu0 0.0
  %868 = vmatpush1.msra.mxu0 0.0
  %869 = vmatprep.subr.mxu0 0.0
  %870 = vmatpush1.msra.mxu0 0.0
  %871 = vmatprep.subr.mxu0 0.0
  %872 = vmatpush1.msra.mxu0 0.0
  %873 = vmatprep.subr.mxu0 0.0
  %874 = vmatpush1.msra.mxu0 0.0
  %875 = vmatprep.subr.mxu0 0.0
  %876 = vmatpush1.msra.mxu0 0.0
  %877 = vmatprep.subr.mxu0 0.0
  %878 = vmatpush1.msra.mxu0 0.0
  %879 = vmatprep.subr.mxu0 %v847
  %880 = vmatpush1.msra.mxu0 %v846
  %881 = vmatprep.subr.mxu0 %v845
  %882 = vmatpush1.msra.mxu0 %v844
  %883 = vmatprep.subr.mxu0 %v843
  %884 = vmatpush1.msra.mxu0 %v842
  %885 = vmatprep.subr.mxu0 %v841
  %886 = vmatpush1.msra.mxu0 %v840
  %887 = vmatprep.subr.mxu0 %v839
  %888 = vmatpush1.msra.mxu0 %v838
  %889 = vmatprep.subr.mxu0 %v837
  %890 = vmatpush1.msra.mxu0 %v836
  %891 = vmatprep.subr.mxu0 %v835
  %892 = vmatpush1.msra.mxu0 %v834
  %893 = vmatprep.subr.mxu0 %v833
  %894 = vmatpush1.msra.mxu0 %v832
  %895 = vmatprep.subr.mxu0 0.0
  %896 = vmatpush2.msra.mxu0 0.0
  %897 = vmatprep.subr.mxu0 0.0
  %898 = vmatpush2.msra.mxu0 0.0
  %899 = vmatprep.subr.mxu0 0.0
  %900 = vmatpush2.msra.mxu0 0.0
  %901 = vmatprep.subr.mxu0 0.0
  %902 = vmatpush2.msra.mxu0 0.0
  %903 = vmatprep.subr.mxu0 0.0
  %904 = vmatpush2.msra.mxu0 0.0
  %905 = vmatprep.subr.mxu0 0.0
  %906 = vmatpush2.msra.mxu0 0.0
  %907 = vmatprep.subr.mxu0 0.0
  %908 = vmatpush2.msra.mxu0 0.0
  %909 = vmatprep.subr.mxu0 0.0
  %910 = vmatpush2.msra.mxu0 0.0
  %911 = vmatprep.subr.mxu0 0.0
  %912 = vmatpush2.msra.mxu0 0.0
  %913 = vmatprep.subr.mxu0 0.0
  %914 = vmatpush2.msra.mxu0 0.0
  %915 = vmatprep.subr.mxu0 0.0
  %916 = vmatpush2.msra.mxu0 0.0
  %917 = vmatprep.subr.mxu0 0.0
  %918 = vmatpush2.msra.mxu0 0.0
  %919 = vmatprep.subr.mxu0 0.0
  %920 = vmatpush2.msra.mxu0 0.0
  %921 = vmatprep.subr.mxu0 0.0
  %922 = vmatpush2.msra.mxu0 0.0
  %923 = vmatprep.subr.mxu0 0.0
  %924 = vmatpush2.msra.mxu0 0.0
  %925 = vmatprep.subr.mxu0 0.0
  %926 = vmatpush2.msra.mxu0 0.0
  %927 = vmatprep.mubr.f32.mxu0 0.0
  %928 = vmatmul.mubr.f32.gmra.mxu0 %v861
  %v929 = vpop.f32.mrf.mxu0
  %v930 = vadd.f32 %v853, %v929
  %v931 = vpop.f32.mrf.mxu0
  %v932 = vadd.f32 %v857, %v931
  %933 = vdwg.mxu0
  %v934 = vld [vmem:[%s731] sm:$0xff]
  %v935 = vld [vmem:[%s729] sm:$0xff]
  %v936 = vadd.f32 %v934, %v930
  %v937 = vxor.u32 %v936, 2147483648
  %v938 = vmul.f32 %v937, 1.442695
  %v939 = vpow.pop %v938
  %v940 = vadd.f32 %v939, 1.0
  %v941 = vrcp.pop %v940
  %v942 = vmul.f32 1.0, %v941
  %944 = vrot.lane.b32.xlu0 %v930, 64
  %v945 = vpop.permute.xlu0 %944
  %v947 = vmul.f32 %v942, %v945
  %949 = vrot.lane.b32.xlu0 %v947, 64
  %v950 = vpop.permute.xlu0 %949
  %v952 = vadd.f32 %v934, %v950
  %v953 = vtanh.pop %v952
  %v954 = vsub.f32 1.0, %v942
  %956 = vrot.lane.b32.xlu0 %v953, 96
  %v957 = vpop.permute.xlu0 %956
  %v959 = vmul.f32 %v954, %v957
  %961 = vrot.lane.b32.xlu0 %v810, 32
  %v962 = vpop.permute.xlu0 %961
  %v964 = vmul.f32 %v942, %v962
  %v965 = vadd.f32 %v959, %v964
  %v966 = vadd.f32 %v935, %v930
  %v967 = vxor.u32 %v966, 2147483648
  %v968 = vmul.f32 %v967, 1.442695
  %v969 = vpow.pop %v968
  %v970 = vadd.f32 %v969, 1.0
  %v971 = vrcp.pop %v970
  %v972 = vmul.f32 1.0, %v971
  %v974 = vrot.slane %v935, 4
  %v976 = vadd.f32 %v974, %v932
  %v977 = vxor.u32 %v976, 2147483648
  %v978 = vmul.f32 %v977, 1.442695
  %v979 = vpow.pop %v978
  %v980 = vadd.f32 %v979, 1.0
  %v981 = vrcp.pop %v980
  %v982 = vmul.f32 1.0, %v981
  %984 = vrot.lane.b32.xlu0 %v932, 64
  %v985 = vpop.permute.xlu0 %984
  %v987 = vmul.f32 %v972, %v985
  %988 = vrot.lane.b32.xlu0 %v935, 96
  %v989 = vpop.permute.xlu0 %988
  %v990 = vrot.slane %v989, 4
  %993 = vrot.lane.b32.xlu0 %v987, 32
  %v994 = vpop.permute.xlu0 %993
  %v996 = vadd.f32 %v990, %v994
  %v997 = vtanh.pop %v996
  %v998 = vsub.f32 1.0, %v982
  %v999 = vmul.f32 %v998, %v997
  %v1000 = vmul.f32 %v982, %v816
  %v1001 = vadd.f32 %v999, %v1000
  %1003 = vrot.lane.b32.xlu0 %v965, 96
  %v1004 = vpop.permute.xlu0 %1003
  %v1006 = vsel %vm815, %v1004, %v810
  %v1007 = vsel %vm805, %v1001, %v816
  %v1008 = vsel %vm815, %v1004, 0.0
  %1009 = vst.msk [vmem:[%s825] sm:$0xf] %vm206, %v1008
  %v1010 = vsel %vm805, %v1001, 0.0
  %1012 = vrot.lane.b32.xlu0 %v1010, 32
  %v1013 = vpop.permute.xlu0 %1012
  %1015 = vst.msk [vmem:[%s818] sm:$0xf] %vm213, %v1013
  %1017 = vrot.lane.b32.xlu0 %v1007, 32
  %v1018 = vpop.permute.xlu0 %1017
  %v1020 = vsel %vm215, %v1006, %v1018
  %v1021 = vld [vmem:[%s2] sm:$0xff]
  %v1022 = vld [vmem:[%s2 + $0x8] sm:$0xff]
  %v1023 = vld [vmem:[%s2 + $0x10] sm:$0xff]
  %v1024 = vld [vmem:[%s2 + $0x18] sm:$0xff]
  %v1025 = vld [vmem:[%s2 + $0x20] sm:$0xff]
  %v1026 = vld [vmem:[%s2 + $0x28] sm:$0xff]
  %v1027 = vld [vmem:[%s2 + $0x30] sm:$0xff]
  %v1028 = vld [vmem:[%s2 + $0x38] sm:$0xff]
  %v1029 = vld [vmem:[%s2 + $0x40] sm:$0xff]
  %v1030 = vld [vmem:[%s2 + $0x48] sm:$0xff]
  %v1031 = vld [vmem:[%s2 + $0x50] sm:$0xff]
  %v1032 = vld [vmem:[%s2 + $0x58] sm:$0xff]
  %v1033 = vld [vmem:[%s2 + $0x60] sm:$0xff]
  %v1034 = vld [vmem:[%s2 + $0x68] sm:$0xff]
  %v1035 = vld [vmem:[%s2 + $0x70] sm:$0xff]
  %v1036 = vld [vmem:[%s2 + $0x78] sm:$0xff]
  %v1037 = vld [vmem:[%s3] sm:$0x3]
  %v1039 = vlaneseq
  %v1040 = vshrl.u32 %v1039, 7
  %v1041 = vsub.s32 0, %v1040
  %v1042 = vrot.slane %v1037, %v1041
  %v1043 = vlaneseq
  %v1044 = vshrl.u32 %v1043, 7
  %v1045 = vsub.s32 1, %v1044
  %v1046 = vrot.slane %v1037, %v1045
  %v1050 = vsel %vm48, %v1020, 0
  %1052 = vmatprep.subr.mxu0 0.0
  %1053 = vmatpush1.msra.mxu0 0.0
  %1054 = vmatprep.subr.mxu0 0.0
  %1055 = vmatpush1.msra.mxu0 0.0
  %1056 = vmatprep.subr.mxu0 0.0
  %1057 = vmatpush1.msra.mxu0 0.0
  %1058 = vmatprep.subr.mxu0 0.0
  %1059 = vmatpush1.msra.mxu0 0.0
  %1060 = vmatprep.subr.mxu0 0.0
  %1061 = vmatpush1.msra.mxu0 0.0
  %1062 = vmatprep.subr.mxu0 0.0
  %1063 = vmatpush1.msra.mxu0 0.0
  %1064 = vmatprep.subr.mxu0 0.0
  %1065 = vmatpush1.msra.mxu0 0.0
  %1066 = vmatprep.subr.mxu0 0.0
  %1067 = vmatpush1.msra.mxu0 0.0
  %1068 = vmatprep.subr.mxu0 %v1036
  %1069 = vmatpush1.msra.mxu0 %v1035
  %1070 = vmatprep.subr.mxu0 %v1034
  %1071 = vmatpush1.msra.mxu0 %v1033
  %1072 = vmatprep.subr.mxu0 %v1032
  %1073 = vmatpush1.msra.mxu0 %v1031
  %1074 = vmatprep.subr.mxu0 %v1030
  %1075 = vmatpush1.msra.mxu0 %v1029
  %1076 = vmatprep.subr.mxu0 %v1028
  %1077 = vmatpush1.msra.mxu0 %v1027
  %1078 = vmatprep.subr.mxu0 %v1026
  %1079 = vmatpush1.msra.mxu0 %v1025
  %1080 = vmatprep.subr.mxu0 %v1024
  %1081 = vmatpush1.msra.mxu0 %v1023
  %1082 = vmatprep.subr.mxu0 %v1022
  %1083 = vmatpush1.msra.mxu0 %v1021
  %1084 = vmatprep.subr.mxu0 0.0
  %1085 = vmatpush2.msra.mxu0 0.0
  %1086 = vmatprep.subr.mxu0 0.0
  %1087 = vmatpush2.msra.mxu0 0.0
  %1088 = vmatprep.subr.mxu0 0.0
  %1089 = vmatpush2.msra.mxu0 0.0
  %1090 = vmatprep.subr.mxu0 0.0
  %1091 = vmatpush2.msra.mxu0 0.0
  %1092 = vmatprep.subr.mxu0 0.0
  %1093 = vmatpush2.msra.mxu0 0.0
  %1094 = vmatprep.subr.mxu0 0.0
  %1095 = vmatpush2.msra.mxu0 0.0
  %1096 = vmatprep.subr.mxu0 0.0
  %1097 = vmatpush2.msra.mxu0 0.0
  %1098 = vmatprep.subr.mxu0 0.0
  %1099 = vmatpush2.msra.mxu0 0.0
  %1100 = vmatprep.subr.mxu0 0.0
  %1101 = vmatpush2.msra.mxu0 0.0
  %1102 = vmatprep.subr.mxu0 0.0
  %1103 = vmatpush2.msra.mxu0 0.0
  %1104 = vmatprep.subr.mxu0 0.0
  %1105 = vmatpush2.msra.mxu0 0.0
  %1106 = vmatprep.subr.mxu0 0.0
  %1107 = vmatpush2.msra.mxu0 0.0
  %1108 = vmatprep.subr.mxu0 0.0
  %1109 = vmatpush2.msra.mxu0 0.0
  %1110 = vmatprep.subr.mxu0 0.0
  %1111 = vmatpush2.msra.mxu0 0.0
  %1112 = vmatprep.subr.mxu0 0.0
  %1113 = vmatpush2.msra.mxu0 0.0
  %1114 = vmatprep.subr.mxu0 0.0
  %1115 = vmatpush2.msra.mxu0 0.0
  %1116 = vmatprep.mubr.f32.mxu0 0.0
  %1117 = vmatmul.mubr.f32.gmra.mxu0 %v1050
  %v1118 = vpop.f32.mrf.mxu0
  %v1119 = vadd.f32 %v1042, %v1118
  %v1120 = vpop.f32.mrf.mxu0
  %v1121 = vadd.f32 %v1046, %v1120
  %1122 = vdwg.mxu0
  %v1123 = vld [vmem:[%s526] sm:$0xff]
  %v1124 = vld [vmem:[%s524] sm:$0xff]
  %v1125 = vadd.f32 %v1123, %v1119
  %v1126 = vxor.u32 %v1125, 2147483648
  %v1127 = vmul.f32 %v1126, 1.442695
  %v1128 = vpow.pop %v1127
  %v1129 = vadd.f32 %v1128, 1.0
  %v1130 = vrcp.pop %v1129
  %v1131 = vmul.f32 1.0, %v1130
  %1133 = vrot.lane.b32.xlu0 %v1119, 64
  %v1134 = vpop.permute.xlu0 %1133
  %v1136 = vmul.f32 %v1131, %v1134
  %1138 = vrot.lane.b32.xlu0 %v1136, 64
  %v1139 = vpop.permute.xlu0 %1138
  %v1141 = vadd.f32 %v1123, %v1139
  %v1142 = vtanh.pop %v1141
  %v1143 = vsub.f32 1.0, %v1131
  %1145 = vrot.lane.b32.xlu0 %v1142, 96
  %v1146 = vpop.permute.xlu0 %1145
  %v1148 = vmul.f32 %v1143, %v1146
  %1150 = vrot.lane.b32.xlu0 %v1006, 32
  %v1151 = vpop.permute.xlu0 %1150
  %v1153 = vmul.f32 %v1131, %v1151
  %v1154 = vadd.f32 %v1148, %v1153
  %v1155 = vadd.f32 %v1124, %v1119
  %v1156 = vxor.u32 %v1155, 2147483648
  %v1157 = vmul.f32 %v1156, 1.442695
  %v1158 = vpow.pop %v1157
  %v1159 = vadd.f32 %v1158, 1.0
  %v1160 = vrcp.pop %v1159
  %v1161 = vmul.f32 1.0, %v1160
  %v1163 = vrot.slane %v1124, 4
  %v1165 = vadd.f32 %v1163, %v1121
  %v1166 = vxor.u32 %v1165, 2147483648
  %v1167 = vmul.f32 %v1166, 1.442695
  %v1168 = vpow.pop %v1167
  %v1169 = vadd.f32 %v1168, 1.0
  %v1170 = vrcp.pop %v1169
  %v1171 = vmul.f32 1.0, %v1170
  %1173 = vrot.lane.b32.xlu0 %v1121, 64
  %v1174 = vpop.permute.xlu0 %1173
  %v1176 = vmul.f32 %v1161, %v1174
  %1177 = vrot.lane.b32.xlu0 %v1124, 96
  %v1178 = vpop.permute.xlu0 %1177
  %v1179 = vrot.slane %v1178, 4
  %1182 = vrot.lane.b32.xlu0 %v1176, 32
  %v1183 = vpop.permute.xlu0 %1182
  %v1185 = vadd.f32 %v1179, %v1183
  %v1186 = vtanh.pop %v1185
  %v1187 = vsub.f32 1.0, %v1171
  %v1188 = vmul.f32 %v1187, %v1186
  %v1189 = vmul.f32 %v1171, %v1007
  %v1190 = vadd.f32 %v1188, %v1189
  %1192 = vrot.lane.b32.xlu0 %v1154, 96
  %v1193 = vpop.permute.xlu0 %1192
  %v1195 = vsel %vm610, %v1193, %v1006
  %v1196 = vsel %vm600, %v1190, %v1007
  %v1197 = vsel %vm610, %v1193, 0.0
  %1198 = vst.msk [vmem:[%s620] sm:$0xf] %vm206, %v1197
  %v1199 = vsel %vm600, %v1190, 0.0
  %1201 = vrot.lane.b32.xlu0 %v1199, 32
  %v1202 = vpop.permute.xlu0 %1201
  %1204 = vst.msk [vmem:[%s613] sm:$0xf] %vm213, %v1202
  %1206 = vrot.lane.b32.xlu0 %v1196, 32
  %v1207 = vpop.permute.xlu0 %1206
  %v1209 = vsel %vm215, %v1195, %v1207
  %v1210 = vld [vmem:[%s2] sm:$0xff]
  %v1211 = vld [vmem:[%s2 + $0x8] sm:$0xff]
  %v1212 = vld [vmem:[%s2 + $0x10] sm:$0xff]
  %v1213 = vld [vmem:[%s2 + $0x18] sm:$0xff]
  %v1214 = vld [vmem:[%s2 + $0x20] sm:$0xff]
  %v1215 = vld [vmem:[%s2 + $0x28] sm:$0xff]
  %v1216 = vld [vmem:[%s2 + $0x30] sm:$0xff]
  %v1217 = vld [vmem:[%s2 + $0x38] sm:$0xff]
  %v1218 = vld [vmem:[%s2 + $0x40] sm:$0xff]
  %v1219 = vld [vmem:[%s2 + $0x48] sm:$0xff]
  %v1220 = vld [vmem:[%s2 + $0x50] sm:$0xff]
  %v1221 = vld [vmem:[%s2 + $0x58] sm:$0xff]
  %v1222 = vld [vmem:[%s2 + $0x60] sm:$0xff]
  %v1223 = vld [vmem:[%s2 + $0x68] sm:$0xff]
  %v1224 = vld [vmem:[%s2 + $0x70] sm:$0xff]
  %v1225 = vld [vmem:[%s2 + $0x78] sm:$0xff]
  %v1226 = vld [vmem:[%s3] sm:$0x3]
  %v1228 = vlaneseq
  %v1229 = vshrl.u32 %v1228, 7
  %v1230 = vsub.s32 0, %v1229
  %v1231 = vrot.slane %v1226, %v1230
  %v1232 = vlaneseq
  %v1233 = vshrl.u32 %v1232, 7
  %v1234 = vsub.s32 1, %v1233
  %v1235 = vrot.slane %v1226, %v1234
  %v1239 = vsel %vm48, %v1209, 0
  %1241 = vmatprep.subr.mxu0 0.0
  %1242 = vmatpush1.msra.mxu0 0.0
  %1243 = vmatprep.subr.mxu0 0.0
  %1244 = vmatpush1.msra.mxu0 0.0
  %1245 = vmatprep.subr.mxu0 0.0
  %1246 = vmatpush1.msra.mxu0 0.0
  %1247 = vmatprep.subr.mxu0 0.0
  %1248 = vmatpush1.msra.mxu0 0.0
  %1249 = vmatprep.subr.mxu0 0.0
  %1250 = vmatpush1.msra.mxu0 0.0
  %1251 = vmatprep.subr.mxu0 0.0
  %1252 = vmatpush1.msra.mxu0 0.0
  %1253 = vmatprep.subr.mxu0 0.0
  %1254 = vmatpush1.msra.mxu0 0.0
  %1255 = vmatprep.subr.mxu0 0.0
  %1256 = vmatpush1.msra.mxu0 0.0
  %1257 = vmatprep.subr.mxu0 %v1225
  %1258 = vmatpush1.msra.mxu0 %v1224
  %1259 = vmatprep.subr.mxu0 %v1223
  %1260 = vmatpush1.msra.mxu0 %v1222
  %1261 = vmatprep.subr.mxu0 %v1221
  %1262 = vmatpush1.msra.mxu0 %v1220
  %1263 = vmatprep.subr.mxu0 %v1219
  %1264 = vmatpush1.msra.mxu0 %v1218
  %1265 = vmatprep.subr.mxu0 %v1217
  %1266 = vmatpush1.msra.mxu0 %v1216
  %1267 = vmatprep.subr.mxu0 %v1215
  %1268 = vmatpush1.msra.mxu0 %v1214
  %1269 = vmatprep.subr.mxu0 %v1213
  %1270 = vmatpush1.msra.mxu0 %v1212
  %1271 = vmatprep.subr.mxu0 %v1211
  %1272 = vmatpush1.msra.mxu0 %v1210
  %1273 = vmatprep.subr.mxu0 0.0
  %1274 = vmatpush2.msra.mxu0 0.0
  %1275 = vmatprep.subr.mxu0 0.0
  %1276 = vmatpush2.msra.mxu0 0.0
  %1277 = vmatprep.subr.mxu0 0.0
  %1278 = vmatpush2.msra.mxu0 0.0
  %1279 = vmatprep.subr.mxu0 0.0
  %1280 = vmatpush2.msra.mxu0 0.0
  %1281 = vmatprep.subr.mxu0 0.0
  %1282 = vmatpush2.msra.mxu0 0.0
  %1283 = vmatprep.subr.mxu0 0.0
  %1284 = vmatpush2.msra.mxu0 0.0
  %1285 = vmatprep.subr.mxu0 0.0
  %1286 = vmatpush2.msra.mxu0 0.0
  %1287 = vmatprep.subr.mxu0 0.0
  %1288 = vmatpush2.msra.mxu0 0.0
  %1289 = vmatprep.subr.mxu0 0.0
  %1290 = vmatpush2.msra.mxu0 0.0
  %1291 = vmatprep.subr.mxu0 0.0
  %1292 = vmatpush2.msra.mxu0 0.0
  %1293 = vmatprep.subr.mxu0 0.0
  %1294 = vmatpush2.msra.mxu0 0.0
  %1295 = vmatprep.subr.mxu0 0.0
  %1296 = vmatpush2.msra.mxu0 0.0
  %1297 = vmatprep.subr.mxu0 0.0
  %1298 = vmatpush2.msra.mxu0 0.0
  %1299 = vmatprep.subr.mxu0 0.0
  %1300 = vmatpush2.msra.mxu0 0.0
  %1301 = vmatprep.subr.mxu0 0.0
  %1302 = vmatpush2.msra.mxu0 0.0
  %1303 = vmatprep.subr.mxu0 0.0
  %1304 = vmatpush2.msra.mxu0 0.0
  %1305 = vmatprep.mubr.f32.mxu0 0.0
  %1306 = vmatmul.mubr.f32.gmra.mxu0 %v1239
  %v1307 = vpop.f32.mrf.mxu0
  %v1308 = vadd.f32 %v1231, %v1307
  %v1309 = vpop.f32.mrf.mxu0
  %v1310 = vadd.f32 %v1235, %v1309
  %1311 = vdwg.mxu0
  %v1312 = vld [vmem:[%s321] sm:$0xff]
  %v1313 = vld [vmem:[%s319] sm:$0xff]
  %v1314 = vadd.f32 %v1312, %v1308
  %v1315 = vxor.u32 %v1314, 2147483648
  %v1316 = vmul.f32 %v1315, 1.442695
  %v1317 = vpow.pop %v1316
  %v1318 = vadd.f32 %v1317, 1.0
  %v1319 = vrcp.pop %v1318
  %v1320 = vmul.f32 1.0, %v1319
  %1322 = vrot.lane.b32.xlu0 %v1308, 64
  %v1323 = vpop.permute.xlu0 %1322
  %v1325 = vmul.f32 %v1320, %v1323
  %1327 = vrot.lane.b32.xlu0 %v1325, 64
  %v1328 = vpop.permute.xlu0 %1327
  %v1330 = vadd.f32 %v1312, %v1328
  %v1331 = vtanh.pop %v1330
  %v1332 = vsub.f32 1.0, %v1320
  %1334 = vrot.lane.b32.xlu0 %v1331, 96
  %v1335 = vpop.permute.xlu0 %1334
  %v1337 = vmul.f32 %v1332, %v1335
  %1339 = vrot.lane.b32.xlu0 %v1195, 32
  %v1340 = vpop.permute.xlu0 %1339
  %v1342 = vmul.f32 %v1320, %v1340
  %v1343 = vadd.f32 %v1337, %v1342
  %v1344 = vadd.f32 %v1313, %v1308
  %v1345 = vxor.u32 %v1344, 2147483648
  %v1346 = vmul.f32 %v1345, 1.442695
  %v1347 = vpow.pop %v1346
  %v1348 = vadd.f32 %v1347, 1.0
  %v1349 = vrcp.pop %v1348
  %v1350 = vmul.f32 1.0, %v1349
  %v1352 = vrot.slane %v1313, 4
  %v1354 = vadd.f32 %v1352, %v1310
  %v1355 = vxor.u32 %v1354, 2147483648
  %v1356 = vmul.f32 %v1355, 1.442695
  %v1357 = vpow.pop %v1356
  %v1358 = vadd.f32 %v1357, 1.0
  %v1359 = vrcp.pop %v1358
  %v1360 = vmul.f32 1.0, %v1359
  %1362 = vrot.lane.b32.xlu0 %v1310, 64
  %v1363 = vpop.permute.xlu0 %1362
  %v1365 = vmul.f32 %v1350, %v1363
  %1366 = vrot.lane.b32.xlu0 %v1313, 96
  %v1367 = vpop.permute.xlu0 %1366
  %v1368 = vrot.slane %v1367, 4
  %1371 = vrot.lane.b32.xlu0 %v1365, 32
  %v1372 = vpop.permute.xlu0 %1371
  %v1374 = vadd.f32 %v1368, %v1372
  %v1375 = vtanh.pop %v1374
  %v1376 = vsub.f32 1.0, %v1360
  %v1377 = vmul.f32 %v1376, %v1375
  %v1378 = vmul.f32 %v1360, %v1196
  %v1379 = vadd.f32 %v1377, %v1378
  %1381 = vrot.lane.b32.xlu0 %v1343, 96
  %v1382 = vpop.permute.xlu0 %1381
  %v1384 = vsel %vm405, %v1382, %v1195
  %v1385 = vsel %vm395, %v1379, %v1196
  %v1386 = vsel %vm405, %v1382, 0.0
  %1387 = vst.msk [vmem:[%s415] sm:$0xf] %vm206, %v1386
  %v1388 = vsel %vm395, %v1379, 0.0
  %1390 = vrot.lane.b32.xlu0 %v1388, 32
  %v1391 = vpop.permute.xlu0 %1390
  %1393 = vst.msk [vmem:[%s408] sm:$0xf] %vm213, %v1391
  %1395 = vrot.lane.b32.xlu0 %v1385, 32
  %v1396 = vpop.permute.xlu0 %1395
  %v1398 = vsel %vm215, %v1384, %v1396
  %v1399 = vld [vmem:[%s2] sm:$0xff]
  %v1400 = vld [vmem:[%s2 + $0x8] sm:$0xff]
  %v1401 = vld [vmem:[%s2 + $0x10] sm:$0xff]
  %v1402 = vld [vmem:[%s2 + $0x18] sm:$0xff]
  %v1403 = vld [vmem:[%s2 + $0x20] sm:$0xff]
  %v1404 = vld [vmem:[%s2 + $0x28] sm:$0xff]
  %v1405 = vld [vmem:[%s2 + $0x30] sm:$0xff]
  %v1406 = vld [vmem:[%s2 + $0x38] sm:$0xff]
  %v1407 = vld [vmem:[%s2 + $0x40] sm:$0xff]
  %v1408 = vld [vmem:[%s2 + $0x48] sm:$0xff]
  %v1409 = vld [vmem:[%s2 + $0x50] sm:$0xff]
  %v1410 = vld [vmem:[%s2 + $0x58] sm:$0xff]
  %v1411 = vld [vmem:[%s2 + $0x60] sm:$0xff]
  %v1412 = vld [vmem:[%s2 + $0x68] sm:$0xff]
  %v1413 = vld [vmem:[%s2 + $0x70] sm:$0xff]
  %v1414 = vld [vmem:[%s2 + $0x78] sm:$0xff]
  %v1415 = vld [vmem:[%s3] sm:$0x3]
  %v1417 = vlaneseq
  %v1418 = vshrl.u32 %v1417, 7
  %v1419 = vsub.s32 0, %v1418
  %v1420 = vrot.slane %v1415, %v1419
  %v1421 = vlaneseq
  %v1422 = vshrl.u32 %v1421, 7
  %v1423 = vsub.s32 1, %v1422
  %v1424 = vrot.slane %v1415, %v1423
  %v1428 = vsel %vm48, %v1398, 0
  %1430 = vmatprep.subr.mxu0 0.0
  %1431 = vmatpush1.msra.mxu0 0.0
  %1432 = vmatprep.subr.mxu0 0.0
  %1433 = vmatpush1.msra.mxu0 0.0
  %1434 = vmatprep.subr.mxu0 0.0
  %1435 = vmatpush1.msra.mxu0 0.0
  %1436 = vmatprep.subr.mxu0 0.0
  %1437 = vmatpush1.msra.mxu0 0.0
  %1438 = vmatprep.subr.mxu0 0.0
  %1439 = vmatpush1.msra.mxu0 0.0
  %1440 = vmatprep.subr.mxu0 0.0
  %1441 = vmatpush1.msra.mxu0 0.0
  %1442 = vmatprep.subr.mxu0 0.0
  %1443 = vmatpush1.msra.mxu0 0.0
  %1444 = vmatprep.subr.mxu0 0.0
  %1445 = vmatpush1.msra.mxu0 0.0
  %1446 = vmatprep.subr.mxu0 %v1414
  %1447 = vmatpush1.msra.mxu0 %v1413
  %1448 = vmatprep.subr.mxu0 %v1412
  %1449 = vmatpush1.msra.mxu0 %v1411
  %1450 = vmatprep.subr.mxu0 %v1410
  %1451 = vmatpush1.msra.mxu0 %v1409
  %1452 = vmatprep.subr.mxu0 %v1408
  %1453 = vmatpush1.msra.mxu0 %v1407
  %1454 = vmatprep.subr.mxu0 %v1406
  %1455 = vmatpush1.msra.mxu0 %v1405
  %1456 = vmatprep.subr.mxu0 %v1404
  %1457 = vmatpush1.msra.mxu0 %v1403
  %1458 = vmatprep.subr.mxu0 %v1402
  %1459 = vmatpush1.msra.mxu0 %v1401
  %1460 = vmatprep.subr.mxu0 %v1400
  %1461 = vmatpush1.msra.mxu0 %v1399
  %1462 = vmatprep.subr.mxu0 0.0
  %1463 = vmatpush2.msra.mxu0 0.0
  %1464 = vmatprep.subr.mxu0 0.0
  %1465 = vmatpush2.msra.mxu0 0.0
  %1466 = vmatprep.subr.mxu0 0.0
  %1467 = vmatpush2.msra.mxu0 0.0
  %1468 = vmatprep.subr.mxu0 0.0
  %1469 = vmatpush2.msra.mxu0 0.0
  %1470 = vmatprep.subr.mxu0 0.0
  %1471 = vmatpush2.msra.mxu0 0.0
  %1472 = vmatprep.subr.mxu0 0.0
  %1473 = vmatpush2.msra.mxu0 0.0
  %1474 = vmatprep.subr.mxu0 0.0
  %1475 = vmatpush2.msra.mxu0 0.0
  %1476 = vmatprep.subr.mxu0 0.0
  %1477 = vmatpush2.msra.mxu0 0.0
  %1478 = vmatprep.subr.mxu0 0.0
  %1479 = vmatpush2.msra.mxu0 0.0
  %1480 = vmatprep.subr.mxu0 0.0
  %1481 = vmatpush2.msra.mxu0 0.0
  %1482 = vmatprep.subr.mxu0 0.0
  %1483 = vmatpush2.msra.mxu0 0.0
  %1484 = vmatprep.subr.mxu0 0.0
  %1485 = vmatpush2.msra.mxu0 0.0
  %1486 = vmatprep.subr.mxu0 0.0
  %1487 = vmatpush2.msra.mxu0 0.0
  %1488 = vmatprep.subr.mxu0 0.0
  %1489 = vmatpush2.msra.mxu0 0.0
  %1490 = vmatprep.subr.mxu0 0.0
  %1491 = vmatpush2.msra.mxu0 0.0
  %1492 = vmatprep.subr.mxu0 0.0
  %1493 = vmatpush2.msra.mxu0 0.0
  %1494 = vmatprep.mubr.f32.mxu0 0.0
  %1495 = vmatmul.mubr.f32.gmra.mxu0 %v1428
  %v1496 = vpop.f32.mrf.mxu0
  %v1497 = vadd.f32 %v1420, %v1496
  %v1498 = vpop.f32.mrf.mxu0
  %v1499 = vadd.f32 %v1424, %v1498
  %1500 = vdwg.mxu0
  %v1501 = vld [vmem:[%s124] sm:$0xff]
  %v1502 = vld [vmem:[%s0] sm:$0xff]
  %v1503 = vadd.f32 %v1501, %v1497
  %v1504 = vxor.u32 %v1503, 2147483648
  %v1505 = vmul.f32 %v1504, 1.442695
  %v1506 = vpow.pop %v1505
  %v1507 = vadd.f32 %v1506, 1.0
  %v1508 = vrcp.pop %v1507
  %v1509 = vmul.f32 1.0, %v1508
  %1511 = vrot.lane.b32.xlu0 %v1497, 64
  %v1512 = vpop.permute.xlu0 %1511
  %v1514 = vmul.f32 %v1509, %v1512
  %1516 = vrot.lane.b32.xlu0 %v1514, 64
  %v1517 = vpop.permute.xlu0 %1516
  %v1519 = vadd.f32 %v1501, %v1517
  %v1520 = vtanh.pop %v1519
  %v1521 = vsub.f32 1.0, %v1509
  %1523 = vrot.lane.b32.xlu0 %v1520, 96
  %v1524 = vpop.permute.xlu0 %1523
  %v1526 = vmul.f32 %v1521, %v1524
  %1528 = vrot.lane.b32.xlu0 %v1384, 32
  %v1529 = vpop.permute.xlu0 %1528
  %v1531 = vmul.f32 %v1509, %v1529
  %v1532 = vadd.f32 %v1526, %v1531
  %v1533 = vadd.f32 %v1502, %v1497
  %v1534 = vxor.u32 %v1533, 2147483648
  %v1535 = vmul.f32 %v1534, 1.442695
  %v1536 = vpow.pop %v1535
  %v1537 = vadd.f32 %v1536, 1.0
  %v1538 = vrcp.pop %v1537
  %v1539 = vmul.f32 1.0, %v1538
  %v1541 = vrot.slane %v1502, 4
  %v1543 = vadd.f32 %v1541, %v1499
  %v1544 = vxor.u32 %v1543, 2147483648
  %v1545 = vmul.f32 %v1544, 1.442695
  %v1546 = vpow.pop %v1545
  %v1547 = vadd.f32 %v1546, 1.0
  %v1548 = vrcp.pop %v1547
  %v1549 = vmul.f32 1.0, %v1548
  %1551 = vrot.lane.b32.xlu0 %v1499, 64
  %v1552 = vpop.permute.xlu0 %1551
  %v1554 = vmul.f32 %v1539, %v1552
  %1555 = vrot.lane.b32.xlu0 %v1502, 96
  %v1556 = vpop.permute.xlu0 %1555
  %v1557 = vrot.slane %v1556, 4
  %1560 = vrot.lane.b32.xlu0 %v1554, 32
  %v1561 = vpop.permute.xlu0 %1560
  %v1563 = vadd.f32 %v1557, %v1561
  %v1564 = vtanh.pop %v1563
  %v1565 = vsub.f32 1.0, %v1549
  %v1566 = vmul.f32 %v1565, %v1564
  %v1567 = vmul.f32 %v1549, %v1385
  %v1568 = vadd.f32 %v1566, %v1567
  %1570 = vrot.lane.b32.xlu0 %v1532, 96
  %v1571 = vpop.permute.xlu0 %1570
  %v1573 = vsel %vm204, %v1571, %v1384
  %v1574 = vsel %vm194, %v1568, %v1385
  %v1575 = vsel %vm204, %v1571, 0.0
  %1576 = vst.msk [vmem:[%s212] sm:$0xf] %vm206, %v1575
  %v1577 = vsel %vm194, %v1568, 0.0
  %1579 = vrot.lane.b32.xlu0 %v1577, 32
  %v1580 = vpop.permute.xlu0 %1579
  %1582 = vst.msk [vmem:[%s4] sm:$0xf] %vm213, %v1580
  %1584 = vrot.lane.b32.xlu0 %v1574, 32
  %v1585 = vpop.permute.xlu0 %1584
  %v1587 = vsel %vm215, %v1573, %v1585
  %vm1588 = vcmask 519168
  %1589 = vst.msk [vmem:[%s5] sm:$0xf] %vm1588, %v1587
  // Predicated region
  $region18: #{encoder_forward.2} parent=0 // pred_check
    _
  $region19: #{encoder_forward.2} parent=0 // pred_check_branch
    %1591 = sbr.rel (0) target = $region21
  $region20: #{encoder_forward.2} parent=0 // pred_region
    _
  $region21: #{encoder_forward.2} parent=0 // pred_fallthru
    _
  // Predicated region
  $region22: #{encoder_forward.2} parent=0 // pred_check
    _
  $region23: #{encoder_forward.2} parent=0 // pred_check_branch
    %1593 = sbr.rel (0) target = $region25
  $region24: #{encoder_forward.2} parent=0 // pred_region
    _
  $region25: #{encoder_forward.2} parent=0 // pred_fallthru
    _
  // Predicated region
  $region26: #{encoder_forward.2} parent=0 // pred_check
    _
  $region27: #{encoder_forward.2} parent=0 // pred_check_branch
    %1595 = sbr.rel (0) target = $region29
  $region28: #{encoder_forward.2} parent=0 // pred_region
    _
  $region29: #{encoder_forward.2} parent=0 // pred_fallthru
    _
  // Predicated region
  $region30: #{encoder_forward.2} parent=0 // pred_check
    _
  $region31: #{encoder_forward.2} parent=0 // pred_check_branch
    %1597 = sbr.rel (0) target = $region33
  $region32: #{encoder_forward.2} parent=0 // pred_region
    _
  $region33: #{encoder_forward.2} parent=0 // pred_fallthru
    _

</llo_original>
